<compile_context>
chip_gen: v7x
topology: tpu7x:2x2x1
jax: 0.10.0
libtpu: 0.0.40
codegen_flags: <defaults>
</compile_context>

<pallas_src>
import functools

import jax
import jax.numpy as jnp
import numpy as np
from jax.experimental import pallas as pl
from jax.experimental.pallas import tpu as pltpu


def mha_kernel(q_ref, k_ref, v_ref,
               wq_ref, bq_ref, wk_ref, bk_ref, wv_ref, bv_ref,
               wfc_ref, bfc_ref, gamma_ref, beta_ref,
               out_ref, *attn_refs, n_head, d_k, d_v, eps):
    """One grid step == TB batch elements.

    Shapes (per step):
      q_ref/k_ref/v_ref : (TB, L, D)        f32
      wq_ref/wk_ref     : (D, H*d_k)        bf16  (wq has 1/temperature folded)
      wv_ref            : (D, H*d_v)        bf16
      bq/bk_ref         : (1, H*d_k)        f32
      bv_ref            : (1, H*d_v)        f32
      wfc_ref           : (H*d_v, D)        bf16
      bfc/gamma/beta    : (1, D)            f32
      out_ref           : (TB, Lq, D)       f32
      attn_refs[0]      : (H, TB, Lq, Lk)   f32 or bf16 (head-major, optional)
    """
    bf16 = jnp.bfloat16
    f32 = jnp.float32
    H = n_head

    TB, Lq, D = q_ref.shape
    Lk = k_ref.shape[1]

    q = q_ref[...]                       # (TB, Lq, D) f32
    k = k_ref[...]
    v = v_ref[...]
    residual = q                         # keep residual in f32

    # ---- Fused lane-dense projections: (TB*L, D) @ (D, H*d), bf16 -> f32 acc.
    q2 = q.reshape(TB * Lq, D).astype(bf16)
    k2 = k.reshape(TB * Lk, D).astype(bf16)
    v2 = v.reshape(TB * Lk, D).astype(bf16)

    qp = jnp.dot(q2, wq_ref[...], preferred_element_type=f32) + bq_ref[...]   # /temp folded
    kp = jnp.dot(k2, wk_ref[...], preferred_element_type=f32) + bk_ref[...]
    vp = jnp.dot(v2, wv_ref[...], preferred_element_type=f32) + bv_ref[...]

    qpb = qp.reshape(TB, Lq, H * d_k).astype(bf16)
    kpb = kp.reshape(TB, Lk, H * d_k).astype(bf16)
    vpb = vp.reshape(TB, Lk, H * d_v).astype(bf16)

    # ---- Per-head attention (heads via static lane slices; batched over TB).
    ctx_parts = []
    for h in range(H):
        q_h = qpb[:, :, h * d_k:(h + 1) * d_k]                 # (TB, Lq, d_k) bf16
        k_h = kpb[:, :, h * d_k:(h + 1) * d_k]                 # (TB, Lk, d_k) bf16
        v_h = vpb[:, :, h * d_v:(h + 1) * d_v]                 # (TB, Lk, d_v) bf16

        # flash-style contraction: no explicit K transpose.
        logits = jnp.einsum('bqe,bke->bqk', q_h, k_h,
                            preferred_element_type=f32)        # (TB, Lq, Lk) f32
        m = jnp.max(logits, axis=-1, keepdims=True)
        e = jnp.exp(logits - m)
        denom = jnp.sum(e, axis=-1, keepdims=True)
        p = e * pl.reciprocal(denom, approx=True)               # softmax probs, f32
        pb = p.astype(bf16)

        if attn_refs:
            # head-major store; no-op cast when attn dtype is f32.
            attn_refs[0][h] = p.astype(attn_refs[0].dtype)

        ctx_parts.append(
            jnp.einsum('bqk,bke->bqe', pb, v_h,
                       preferred_element_type=f32).astype(bf16))  # (TB, Lq, d_v)

    # ---- Output projection: head-sum as MXU K-reduction (K = H*d_v).
    ctx = jnp.concatenate(ctx_parts, axis=-1).reshape(TB * Lq, H * d_v)   # bf16
    x = jnp.dot(ctx, wfc_ref[...], preferred_element_type=f32)           # (TB*Lq, D)
    x = x.reshape(TB, Lq, D) + bfc_ref[...] + residual                   # f32

    # ---- LayerNorm(d_model) in f32.
    mean = jnp.mean(x, axis=-1, keepdims=True)
    var = jnp.mean(jnp.square(x - mean), axis=-1, keepdims=True)
    y = (x - mean) * jax.lax.rsqrt(var + eps)
    out_ref[...] = (y * gamma_ref[...] + beta_ref[...]).astype(out_ref.dtype)


def _pick_block_b(batch, len_q, block_b=None):
    """Pick how many batch elements to fold into one grid step (must divide B)."""
    if block_b is not None:
        assert batch % block_b == 0
        return block_b
    target = max(1, 256 // max(len_q, 1))   # aim for >=~256 matmul rows per step
    tb = 1
    for cand in range(1, batch + 1):
        if batch % cand == 0 and cand <= target:
            tb = cand
    return tb


def _vmem_limit_bytes():
    """~75% of physical VMEM per core: 96 MiB on v5e/v6e, 48 MiB on v7x."""
    try:
        cap = int(pltpu.get_tpu_info().vmem_capacity_bytes)
    except Exception:
        cap = 64 * 1024 * 1024
    return max(32 * 1024 * 1024, min(cap * 3 // 4, 100 * 1024 * 1024))


def multi_head_attention(q, k, v, params, *, n_head, d_k, d_v,
                         return_attn=True, attn_dtype=jnp.float32,
                         block_b=None):
    """q,k,v: [B, L, d_model] float32.

    Returns (output [B, Lq, d_model], attn [n_head*B, Lq, Lk]) if return_attn,
    else just output."""
    B, Lq, D = q.shape
    _, Lk, _ = k.shape
    H = n_head
    temperature = float(np.power(d_k, 0.5))
    TB = _pick_block_b(B, Lq, block_b)

    # One-time wrapper-side weight re-layout: (in, out) orientation so the
    # kernel does x @ W (lane-dense N = H*d_k / H*d_v / D), 1/temperature
    # folded into the Q projection, bf16 weights for the MXU, f32 biases.
    wq_t = (params["wq"].T / temperature).astype(jnp.bfloat16)             # (D, H*d_k)
    bq_t = (params["bq"].reshape(1, H * d_k) / temperature).astype(jnp.float32)
    wk_t = params["wk"].T.astype(jnp.bfloat16)                              # (D, H*d_k)
    bk_t = params["bk"].reshape(1, H * d_k).astype(jnp.float32)
    wv_t = params["wv"].T.astype(jnp.bfloat16)                              # (D, H*d_v)
    bv_t = params["bv"].reshape(1, H * d_v).astype(jnp.float32)
    wfc_t = params["wfc"].T.astype(jnp.bfloat16)                            # (H*d_v, D)
    bfc = params["bfc"].reshape(1, D).astype(jnp.float32)
    gamma = params["gamma"].reshape(1, D).astype(jnp.float32)
    beta = params["beta"].reshape(1, D).astype(jnp.float32)

    def rep(a):   # replicated (constant-index) operand
        nd = a.ndim
        return pl.BlockSpec(a.shape, lambda b, _nd=nd: (0,) * _nd)

    in_specs = [
        pl.BlockSpec((TB, Lq, D), lambda b: (b, 0, 0)),   # q
        pl.BlockSpec((TB, Lk, D), lambda b: (b, 0, 0)),   # k
        pl.BlockSpec((TB, Lk, D), lambda b: (b, 0, 0)),   # v
        rep(wq_t), rep(bq_t), rep(wk_t), rep(bk_t), rep(wv_t), rep(bv_t),
        rep(wfc_t), rep(bfc), rep(gamma), rep(beta),
    ]

    if return_attn:
        out_shape = (
            jax.ShapeDtypeStruct((B, Lq, D), jnp.float32),
            jax.ShapeDtypeStruct((H, B, Lq, Lk), attn_dtype),   # head-major
        )
        out_specs = (
            pl.BlockSpec((TB, Lq, D), lambda b: (b, 0, 0)),
            pl.BlockSpec((H, TB, Lq, Lk), lambda b: (0, b, 0, 0)),
        )
    else:
        out_shape = jax.ShapeDtypeStruct((B, Lq, D), jnp.float32)
        out_specs = pl.BlockSpec((TB, Lq, D), lambda b: (b, 0, 0))

    kernel = functools.partial(mha_kernel, n_head=H, d_k=d_k, d_v=d_v, eps=1e-5)

    result = pl.pallas_call(
        kernel,
        out_shape=out_shape,
        grid=(B // TB,),
        in_specs=in_specs,
        out_specs=out_specs,
        compiler_params=pltpu.CompilerParams(
            dimension_semantics=("parallel",),
            vmem_limit_bytes=_vmem_limit_bytes(),
        ),
    )(q, k, v, wq_t, bq_t, wk_t, bk_t, wv_t, bv_t, wfc_t, bfc, gamma, beta)

    if return_attn:
        out, attn = result
        # torch layout [n_head * batch, len_q, len_k]; attn is already
        # head-major, so this reshape is a pure view (no transpose kernel).
        return out, attn.reshape(H * B, Lq, Lk)
    return result


def mha_reference(q, k, v, params, *, n_head, d_k, d_v, eps=1e-5):
    """Pure-JAX f32 reference mirroring the PyTorch module (eval mode)."""
    B, Lq, D = q.shape
    _, Lk, _ = k.shape
    temp = float(np.power(d_k, 0.5))
    qp = q @ params["wq"].T + params["bq"]
    kp = k @ params["wk"].T + params["bk"]
    vp = v @ params["wv"].T + params["bv"]
    qh = qp.reshape(B, Lq, n_head, d_k).transpose(2, 0, 1, 3).reshape(-1, Lq, d_k)
    kh = kp.reshape(B, Lk, n_head, d_k).transpose(2, 0, 1, 3).reshape(-1, Lk, d_k)
    vh = vp.reshape(B, Lk, n_head, d_v).transpose(2, 0, 1, 3).reshape(-1, Lk, d_v)
    logits = jnp.einsum('nqd,nkd->nqk', qh, kh) / temp
    attn = jax.nn.softmax(logits, axis=-1)
    outh = jnp.einsum('nqk,nkd->nqd', attn, vh)
    outh = outh.reshape(n_head, B, Lq, d_v).transpose(1, 2, 0, 3).reshape(B, Lq, n_head * d_v)
    x = outh @ params["wfc"].T + params["bfc"] + q
    mu = x.mean(-1, keepdims=True)
    var = ((x - mu) ** 2).mean(-1, keepdims=True)
    y = (x - mu) / jnp.sqrt(var + eps) * params["gamma"] + params["beta"]
    return y, attn


def init_params(key, n_head, d_model, d_k, d_v):
    ks = jax.random.split(key, 8)
    std_qk = float(np.sqrt(2.0 / (d_model + d_k)))
    std_fc = float(np.sqrt(2.0 / (n_head * d_v + d_model)))  # xavier_normal
    return {
        "wq": std_qk * jax.random.normal(ks[0], (n_head * d_k, d_model), jnp.float32),
        "bq": 0.01 * jax.random.normal(ks[1], (n_head * d_k,), jnp.float32),
        "wk": std_qk * jax.random.normal(ks[2], (n_head * d_k, d_model), jnp.float32),
        "bk": 0.01 * jax.random.normal(ks[3], (n_head * d_k,), jnp.float32),
        "wv": std_qk * jax.random.normal(ks[4], (n_head * d_v, d_model), jnp.float32),
        "bv": 0.01 * jax.random.normal(ks[5], (n_head * d_v,), jnp.float32),
        "wfc": std_fc * jax.random.normal(ks[6], (d_model, n_head * d_v), jnp.float32),
        "bfc": 0.01 * jax.random.normal(ks[7], (d_model,), jnp.float32),
        "gamma": jnp.ones((d_model,), jnp.float32),
        "beta": jnp.zeros((d_model,), jnp.float32),
    }


if __name__ == "__main__":
    # Small shapes consistent with the module's forward.
    batch, seq, d_model = 2, 8, 32
    n_head, d_k, d_v = 4, 8, 8

    key = jax.random.PRNGKey(0)
    kq, kk, kv, kp = jax.random.split(key, 4)
    q = jax.random.normal(kq, (batch, seq, d_model), jnp.float32)
    k = jax.random.normal(kk, (batch, seq, d_model), jnp.float32)
    v = jax.random.normal(kv, (batch, seq, d_model), jnp.float32)

    params = init_params(kp, n_head, d_model, d_k, d_v)

    out, attn = multi_head_attention(q, k, v, params,
                                     n_head=n_head, d_k=d_k, d_v=d_v)
    jax.block_until_ready((out, attn))

    assert out.shape == (batch, seq, d_model)
    assert attn.shape == (n_head * batch, seq, seq)

    # Self-check against the pure-JAX f32 reference (tolerances account for
    # bf16 MXU operands and approx reciprocal, by design).
    out_ref, attn_ref = mha_reference(q, k, v, params,
                                      n_head=n_head, d_k=d_k, d_v=d_v)
    assert float(jnp.max(jnp.abs(attn - attn_ref))) < 0.05
    assert float(jnp.max(jnp.abs(out - out_ref))) < 0.2

    # Exercise the attn-free (bandwidth-saving) path as well.
    out_only = multi_head_attention(q, k, v, params,
                                    n_head=n_head, d_k=d_k, d_v=d_v,
                                    return_attn=False)
    jax.block_until_ready(out_only)
    assert out_only.shape == (batch, seq, d_model)

    print("KERNEL_OK")
</pallas_src>

<mosaic_0001>
module attributes {stable_mosaic.version = 11 : i64} {
  func.func @mha_kernel(%arg0: i32, %arg1: memref<2x8x32xf32, #tpu.memory_space<vmem>>, %arg2: memref<2x8x32xf32, #tpu.memory_space<vmem>>, %arg3: memref<2x8x32xf32, #tpu.memory_space<vmem>>, %arg4: memref<32x32xbf16, #tpu.memory_space<vmem>>, %arg5: memref<1x32xf32, #tpu.memory_space<vmem>>, %arg6: memref<32x32xbf16, #tpu.memory_space<vmem>>, %arg7: memref<1x32xf32, #tpu.memory_space<vmem>>, %arg8: memref<32x32xbf16, #tpu.memory_space<vmem>>, %arg9: memref<1x32xf32, #tpu.memory_space<vmem>>, %arg10: memref<32x32xbf16, #tpu.memory_space<vmem>>, %arg11: memref<1x32xf32, #tpu.memory_space<vmem>>, %arg12: memref<1x32xf32, #tpu.memory_space<vmem>>, %arg13: memref<1x32xf32, #tpu.memory_space<vmem>>, %arg14: memref<2x8x32xf32, #tpu.memory_space<vmem>>, %arg15: memref<4x2x8x8xf32, #tpu.memory_space<vmem>>) attributes {dimension_semantics = [#tpu.dimension_semantics<parallel>], iteration_bounds = array<i64: 1>, scalar_prefetch = 0 : i64, scratch_operands = 0 : i64, tpu.core_type = #tpu.core_type<tc>, window_params = [{transform_indices = @transform_0, window_bounds = array<i64: 2, 8, 32>}, {transform_indices = @transform_1, window_bounds = array<i64: 2, 8, 32>}, {transform_indices = @transform_2, window_bounds = array<i64: 2, 8, 32>}, {pipeline_mode = #tpu.pipeline_mode<synchronous>, transform_indices = @transform_3, window_bounds = array<i64: 32, 32>}, {pipeline_mode = #tpu.pipeline_mode<synchronous>, transform_indices = @transform_4, window_bounds = array<i64: 1, 32>}, {pipeline_mode = #tpu.pipeline_mode<synchronous>, transform_indices = @transform_5, window_bounds = array<i64: 32, 32>}, {pipeline_mode = #tpu.pipeline_mode<synchronous>, transform_indices = @transform_6, window_bounds = array<i64: 1, 32>}, {pipeline_mode = #tpu.pipeline_mode<synchronous>, transform_indices = @transform_7, window_bounds = array<i64: 32, 32>}, {pipeline_mode = #tpu.pipeline_mode<synchronous>, transform_indices = @transform_8, window_bounds = array<i64: 1, 32>}, {pipeline_mode = #tpu.pipeline_mode<synchronous>, transform_indices = @transform_9, window_bounds = array<i64: 32, 32>}, {pipeline_mode = #tpu.pipeline_mode<synchronous>, transform_indices = @transform_10, window_bounds = array<i64: 1, 32>}, {pipeline_mode = #tpu.pipeline_mode<synchronous>, transform_indices = @transform_11, window_bounds = array<i64: 1, 32>}, {pipeline_mode = #tpu.pipeline_mode<synchronous>, transform_indices = @transform_12, window_bounds = array<i64: 1, 32>}, {transform_indices = @transform_13, window_bounds = array<i64: 2, 8, 32>}, {transform_indices = @transform_14, window_bounds = array<i64: 4, 2, 8, 8>}]} {
    %c0 = arith.constant 0 : index
    %c0_0 = arith.constant 0 : index
    %c0_1 = arith.constant 0 : index
    %0 = vector.load %arg1[%c0, %c0_0, %c0_1] : memref<2x8x32xf32, #tpu.memory_space<vmem>>, vector<2x8x32xf32>
    %c0_2 = arith.constant 0 : index
    %c0_3 = arith.constant 0 : index
    %c0_4 = arith.constant 0 : index
    %1 = vector.load %arg2[%c0_2, %c0_3, %c0_4] : memref<2x8x32xf32, #tpu.memory_space<vmem>>, vector<2x8x32xf32>
    %c0_5 = arith.constant 0 : index
    %c0_6 = arith.constant 0 : index
    %c0_7 = arith.constant 0 : index
    %2 = vector.load %arg3[%c0_5, %c0_6, %c0_7] : memref<2x8x32xf32, #tpu.memory_space<vmem>>, vector<2x8x32xf32>
    %3 = vector.shape_cast %0 : vector<2x8x32xf32> to vector<16x32xf32>
    %4 = arith.truncf %3 : vector<16x32xf32> to vector<16x32xbf16>
    %5 = vector.shape_cast %1 : vector<2x8x32xf32> to vector<16x32xf32>
    %6 = arith.truncf %5 : vector<16x32xf32> to vector<16x32xbf16>
    %7 = vector.shape_cast %2 : vector<2x8x32xf32> to vector<16x32xf32>
    %8 = arith.truncf %7 : vector<16x32xf32> to vector<16x32xbf16>
    %c0_8 = arith.constant 0 : index
    %c0_9 = arith.constant 0 : index
    %9 = vector.load %arg4[%c0_8, %c0_9] : memref<32x32xbf16, #tpu.memory_space<vmem>>, vector<32x32xbf16>
    %cst = arith.constant dense<0.000000e+00> : vector<16x32xf32>
    %10 = tpu.matmul %4, %9, %cst {dimension_numbers = #tpu.dot_dimension_numbers<[1], [0], [0], [1], [0, 0, 1, 1], [], []>} : vector<16x32xbf16>, vector<32x32xbf16>, vector<16x32xf32> -> vector<16x32xf32>
    %c0_10 = arith.constant 0 : index
    %c0_11 = arith.constant 0 : index
    %11 = vector.load %arg5[%c0_10, %c0_11] : memref<1x32xf32, #tpu.memory_space<vmem>>, vector<1x32xf32>
    %12 = vector.broadcast %11 : vector<1x32xf32> to vector<16x32xf32>
    %13 = arith.addf %10, %12 : vector<16x32xf32>
    %c0_12 = arith.constant 0 : index
    %c0_13 = arith.constant 0 : index
    %14 = vector.load %arg6[%c0_12, %c0_13] : memref<32x32xbf16, #tpu.memory_space<vmem>>, vector<32x32xbf16>
    %cst_14 = arith.constant dense<0.000000e+00> : vector<16x32xf32>
    %15 = tpu.matmul %6, %14, %cst_14 {dimension_numbers = #tpu.dot_dimension_numbers<[1], [0], [0], [1], [0, 0, 1, 1], [], []>} : vector<16x32xbf16>, vector<32x32xbf16>, vector<16x32xf32> -> vector<16x32xf32>
    %c0_15 = arith.constant 0 : index
    %c0_16 = arith.constant 0 : index
    %16 = vector.load %arg7[%c0_15, %c0_16] : memref<1x32xf32, #tpu.memory_space<vmem>>, vector<1x32xf32>
    %17 = vector.broadcast %16 : vector<1x32xf32> to vector<16x32xf32>
    %18 = arith.addf %15, %17 : vector<16x32xf32>
    %c0_17 = arith.constant 0 : index
    %c0_18 = arith.constant 0 : index
    %19 = vector.load %arg8[%c0_17, %c0_18] : memref<32x32xbf16, #tpu.memory_space<vmem>>, vector<32x32xbf16>
    %cst_19 = arith.constant dense<0.000000e+00> : vector<16x32xf32>
    %20 = tpu.matmul %8, %19, %cst_19 {dimension_numbers = #tpu.dot_dimension_numbers<[1], [0], [0], [1], [0, 0, 1, 1], [], []>} : vector<16x32xbf16>, vector<32x32xbf16>, vector<16x32xf32> -> vector<16x32xf32>
    %c0_20 = arith.constant 0 : index
    %c0_21 = arith.constant 0 : index
    %21 = vector.load %arg9[%c0_20, %c0_21] : memref<1x32xf32, #tpu.memory_space<vmem>>, vector<1x32xf32>
    %22 = vector.broadcast %21 : vector<1x32xf32> to vector<16x32xf32>
    %23 = arith.addf %20, %22 : vector<16x32xf32>
    %24 = vector.shape_cast %13 : vector<16x32xf32> to vector<2x8x32xf32>
    %25 = arith.truncf %24 : vector<2x8x32xf32> to vector<2x8x32xbf16>
    %26 = vector.shape_cast %18 : vector<16x32xf32> to vector<2x8x32xf32>
    %27 = arith.truncf %26 : vector<2x8x32xf32> to vector<2x8x32xbf16>
    %28 = vector.shape_cast %23 : vector<16x32xf32> to vector<2x8x32xf32>
    %29 = arith.truncf %28 : vector<2x8x32xf32> to vector<2x8x32xbf16>
    %30 = vector.extract_strided_slice %25 {offsets = [0, 0, 0], sizes = [2, 8, 8], strides = [1, 1, 1]} : vector<2x8x32xbf16> to vector<2x8x8xbf16>
    %31 = vector.extract_strided_slice %27 {offsets = [0, 0, 0], sizes = [2, 8, 8], strides = [1, 1, 1]} : vector<2x8x32xbf16> to vector<2x8x8xbf16>
    %32 = vector.extract_strided_slice %29 {offsets = [0, 0, 0], sizes = [2, 8, 8], strides = [1, 1, 1]} : vector<2x8x32xbf16> to vector<2x8x8xbf16>
    "tpu.trace_start"() <{level = 10 : i32, message = "bqe,bke->bqk"}> : () -> ()
    %cst_22 = arith.constant dense<0.000000e+00> : vector<2x8x8xf32>
    %33 = tpu.matmul %30, %31, %cst_22 {dimension_numbers = #tpu.dot_dimension_numbers<[2], [2], [1], [1], [0, 0, 0, 1, 1, 1], [0], [0]>} : vector<2x8x8xbf16>, vector<2x8x8xbf16>, vector<2x8x8xf32> -> vector<2x8x8xf32>
    "tpu.trace_stop"() : () -> ()
    %cst_23 = arith.constant dense<0xFF800000> : vector<2x8xf32>
    %34 = vector.multi_reduction <maximumf>, %33, %cst_23 [2] : vector<2x8x8xf32> to vector<2x8xf32>
    %35 = vector.shape_cast %34 : vector<2x8xf32> to vector<2x8x1xf32>
    %36 = vector.broadcast %35 : vector<2x8x1xf32> to vector<2x8x8xf32>
    %37 = arith.subf %33, %36 : vector<2x8x8xf32>
    %38 = math.exp %37 : vector<2x8x8xf32>
    %cst_24 = arith.constant dense<0.000000e+00> : vector<2x8xf32>
    %39 = vector.multi_reduction <add>, %38, %cst_24 [2] : vector<2x8x8xf32> to vector<2x8xf32>
    %40 = vector.shape_cast %39 : vector<2x8xf32> to vector<2x8x1xf32>
    %41 = tpu.reciprocal %40 {approx = true} : vector<2x8x1xf32> -> vector<2x8x1xf32>
    %42 = vector.broadcast %41 : vector<2x8x1xf32> to vector<2x8x8xf32>
    %43 = arith.mulf %38, %42 : vector<2x8x8xf32>
    %44 = arith.truncf %43 : vector<2x8x8xf32> to vector<2x8x8xbf16>
    %c0_25 = arith.constant 0 : index
    %c0_26 = arith.constant 0 : index
    %c0_27 = arith.constant 0 : index
    %c0_28 = arith.constant 0 : index
    %45 = vector.load %arg15[%c0_25, %c0_26, %c0_27, %c0_28] : memref<4x2x8x8xf32, #tpu.memory_space<vmem>>, vector<1x2x8x8xf32>
    %46 = vector.shape_cast %45 : vector<1x2x8x8xf32> to vector<2x8x8xf32>
    %47 = vector.shape_cast %43 : vector<2x8x8xf32> to vector<1x2x8x8xf32>
    tpu.vector_store %arg15[%c0_25, %c0_26, %c0_27, %c0_28], %47 {strides = array<i32>} : memref<4x2x8x8xf32, #tpu.memory_space<vmem>>, vector<1x2x8x8xf32>,
    "tpu.trace_start"() <{level = 10 : i32, message = "bqk,bke->bqe"}> : () -> ()
    %cst_29 = arith.constant dense<0.000000e+00> : vector<2x8x8xf32>
    %48 = tpu.matmul %44, %32, %cst_29 {dimension_numbers = #tpu.dot_dimension_numbers<[2], [1], [1], [2], [0, 0, 0, 1, 1, 2], [0], [0]>} : vector<2x8x8xbf16>, vector<2x8x8xbf16>, vector<2x8x8xf32> -> vector<2x8x8xf32>
    "tpu.trace_stop"() : () -> ()
    %49 = arith.truncf %48 : vector<2x8x8xf32> to vector<2x8x8xbf16>
    %50 = vector.extract_strided_slice %25 {offsets = [0, 0, 8], sizes = [2, 8, 8], strides = [1, 1, 1]} : vector<2x8x32xbf16> to vector<2x8x8xbf16>
    %51 = vector.extract_strided_slice %27 {offsets = [0, 0, 8], sizes = [2, 8, 8], strides = [1, 1, 1]} : vector<2x8x32xbf16> to vector<2x8x8xbf16>
    %52 = vector.extract_strided_slice %29 {offsets = [0, 0, 8], sizes = [2, 8, 8], strides = [1, 1, 1]} : vector<2x8x32xbf16> to vector<2x8x8xbf16>
    "tpu.trace_start"() <{level = 10 : i32, message = "bqe,bke->bqk"}> : () -> ()
    %cst_30 = arith.constant dense<0.000000e+00> : vector<2x8x8xf32>
    %53 = tpu.matmul %50, %51, %cst_30 {dimension_numbers = #tpu.dot_dimension_numbers<[2], [2], [1], [1], [0, 0, 0, 1, 1, 1], [0], [0]>} : vector<2x8x8xbf16>, vector<2x8x8xbf16>, vector<2x8x8xf32> -> vector<2x8x8xf32>
    "tpu.trace_stop"() : () -> ()
    %cst_31 = arith.constant dense<0xFF800000> : vector<2x8xf32>
    %54 = vector.multi_reduction <maximumf>, %53, %cst_31 [2] : vector<2x8x8xf32> to vector<2x8xf32>
    %55 = vector.shape_cast %54 : vector<2x8xf32> to vector<2x8x1xf32>
    %56 = vector.broadcast %55 : vector<2x8x1xf32> to vector<2x8x8xf32>
    %57 = arith.subf %53, %56 : vector<2x8x8xf32>
    %58 = math.exp %57 : vector<2x8x8xf32>
    %cst_32 = arith.constant dense<0.000000e+00> : vector<2x8xf32>
    %59 = vector.multi_reduction <add>, %58, %cst_32 [2] : vector<2x8x8xf32> to vector<2x8xf32>
    %60 = vector.shape_cast %59 : vector<2x8xf32> to vector<2x8x1xf32>
    %61 = tpu.reciprocal %60 {approx = true} : vector<2x8x1xf32> -> vector<2x8x1xf32>
    %62 = vector.broadcast %61 : vector<2x8x1xf32> to vector<2x8x8xf32>
    %63 = arith.mulf %58, %62 : vector<2x8x8xf32>
    %64 = arith.truncf %63 : vector<2x8x8xf32> to vector<2x8x8xbf16>
    %c1 = arith.constant 1 : index
    %c0_33 = arith.constant 0 : index
    %c0_34 = arith.constant 0 : index
    %c0_35 = arith.constant 0 : index
    %65 = vector.load %arg15[%c1, %c0_33, %c0_34, %c0_35] : memref<4x2x8x8xf32, #tpu.memory_space<vmem>>, vector<1x2x8x8xf32>
    %66 = vector.shape_cast %65 : vector<1x2x8x8xf32> to vector<2x8x8xf32>
    %67 = vector.shape_cast %63 : vector<2x8x8xf32> to vector<1x2x8x8xf32>
    tpu.vector_store %arg15[%c1, %c0_33, %c0_34, %c0_35], %67 {strides = array<i32>} : memref<4x2x8x8xf32, #tpu.memory_space<vmem>>, vector<1x2x8x8xf32>,
    "tpu.trace_start"() <{level = 10 : i32, message = "bqk,bke->bqe"}> : () -> ()
    %cst_36 = arith.constant dense<0.000000e+00> : vector<2x8x8xf32>
    %68 = tpu.matmul %64, %52, %cst_36 {dimension_numbers = #tpu.dot_dimension_numbers<[2], [1], [1], [2], [0, 0, 0, 1, 1, 2], [0], [0]>} : vector<2x8x8xbf16>, vector<2x8x8xbf16>, vector<2x8x8xf32> -> vector<2x8x8xf32>
    "tpu.trace_stop"() : () -> ()
    %69 = arith.truncf %68 : vector<2x8x8xf32> to vector<2x8x8xbf16>
    %70 = vector.extract_strided_slice %25 {offsets = [0, 0, 16], sizes = [2, 8, 8], strides = [1, 1, 1]} : vector<2x8x32xbf16> to vector<2x8x8xbf16>
    %71 = vector.extract_strided_slice %27 {offsets = [0, 0, 16], sizes = [2, 8, 8], strides = [1, 1, 1]} : vector<2x8x32xbf16> to vector<2x8x8xbf16>
    %72 = vector.extract_strided_slice %29 {offsets = [0, 0, 16], sizes = [2, 8, 8], strides = [1, 1, 1]} : vector<2x8x32xbf16> to vector<2x8x8xbf16>
    "tpu.trace_start"() <{level = 10 : i32, message = "bqe,bke->bqk"}> : () -> ()
    %cst_37 = arith.constant dense<0.000000e+00> : vector<2x8x8xf32>
    %73 = tpu.matmul %70, %71, %cst_37 {dimension_numbers = #tpu.dot_dimension_numbers<[2], [2], [1], [1], [0, 0, 0, 1, 1, 1], [0], [0]>} : vector<2x8x8xbf16>, vector<2x8x8xbf16>, vector<2x8x8xf32> -> vector<2x8x8xf32>
    "tpu.trace_stop"() : () -> ()
    %cst_38 = arith.constant dense<0xFF800000> : vector<2x8xf32>
    %74 = vector.multi_reduction <maximumf>, %73, %cst_38 [2] : vector<2x8x8xf32> to vector<2x8xf32>
    %75 = vector.shape_cast %74 : vector<2x8xf32> to vector<2x8x1xf32>
    %76 = vector.broadcast %75 : vector<2x8x1xf32> to vector<2x8x8xf32>
    %77 = arith.subf %73, %76 : vector<2x8x8xf32>
    %78 = math.exp %77 : vector<2x8x8xf32>
    %cst_39 = arith.constant dense<0.000000e+00> : vector<2x8xf32>
    %79 = vector.multi_reduction <add>, %78, %cst_39 [2] : vector<2x8x8xf32> to vector<2x8xf32>
    %80 = vector.shape_cast %79 : vector<2x8xf32> to vector<2x8x1xf32>
    %81 = tpu.reciprocal %80 {approx = true} : vector<2x8x1xf32> -> vector<2x8x1xf32>
    %82 = vector.broadcast %81 : vector<2x8x1xf32> to vector<2x8x8xf32>
    %83 = arith.mulf %78, %82 : vector<2x8x8xf32>
    %84 = arith.truncf %83 : vector<2x8x8xf32> to vector<2x8x8xbf16>
    %c2 = arith.constant 2 : index
    %c0_40 = arith.constant 0 : index
    %c0_41 = arith.constant 0 : index
    %c0_42 = arith.constant 0 : index
    %85 = vector.load %arg15[%c2, %c0_40, %c0_41, %c0_42] : memref<4x2x8x8xf32, #tpu.memory_space<vmem>>, vector<1x2x8x8xf32>
    %86 = vector.shape_cast %85 : vector<1x2x8x8xf32> to vector<2x8x8xf32>
    %87 = vector.shape_cast %83 : vector<2x8x8xf32> to vector<1x2x8x8xf32>
    tpu.vector_store %arg15[%c2, %c0_40, %c0_41, %c0_42], %87 {strides = array<i32>} : memref<4x2x8x8xf32, #tpu.memory_space<vmem>>, vector<1x2x8x8xf32>,
    "tpu.trace_start"() <{level = 10 : i32, message = "bqk,bke->bqe"}> : () -> ()
    %cst_43 = arith.constant dense<0.000000e+00> : vector<2x8x8xf32>
    %88 = tpu.matmul %84, %72, %cst_43 {dimension_numbers = #tpu.dot_dimension_numbers<[2], [1], [1], [2], [0, 0, 0, 1, 1, 2], [0], [0]>} : vector<2x8x8xbf16>, vector<2x8x8xbf16>, vector<2x8x8xf32> -> vector<2x8x8xf32>
    "tpu.trace_stop"() : () -> ()
    %89 = arith.truncf %88 : vector<2x8x8xf32> to vector<2x8x8xbf16>
    %90 = vector.extract_strided_slice %25 {offsets = [0, 0, 24], sizes = [2, 8, 8], strides = [1, 1, 1]} : vector<2x8x32xbf16> to vector<2x8x8xbf16>
    %91 = vector.extract_strided_slice %27 {offsets = [0, 0, 24], sizes = [2, 8, 8], strides = [1, 1, 1]} : vector<2x8x32xbf16> to vector<2x8x8xbf16>
    %92 = vector.extract_strided_slice %29 {offsets = [0, 0, 24], sizes = [2, 8, 8], strides = [1, 1, 1]} : vector<2x8x32xbf16> to vector<2x8x8xbf16>
    "tpu.trace_start"() <{level = 10 : i32, message = "bqe,bke->bqk"}> : () -> ()
    %cst_44 = arith.constant dense<0.000000e+00> : vector<2x8x8xf32>
    %93 = tpu.matmul %90, %91, %cst_44 {dimension_numbers = #tpu.dot_dimension_numbers<[2], [2], [1], [1], [0, 0, 0, 1, 1, 1], [0], [0]>} : vector<2x8x8xbf16>, vector<2x8x8xbf16>, vector<2x8x8xf32> -> vector<2x8x8xf32>
    "tpu.trace_stop"() : () -> ()
    %cst_45 = arith.constant dense<0xFF800000> : vector<2x8xf32>
    %94 = vector.multi_reduction <maximumf>, %93, %cst_45 [2] : vector<2x8x8xf32> to vector<2x8xf32>
    %95 = vector.shape_cast %94 : vector<2x8xf32> to vector<2x8x1xf32>
    %96 = vector.broadcast %95 : vector<2x8x1xf32> to vector<2x8x8xf32>
    %97 = arith.subf %93, %96 : vector<2x8x8xf32>
    %98 = math.exp %97 : vector<2x8x8xf32>
    %cst_46 = arith.constant dense<0.000000e+00> : vector<2x8xf32>
    %99 = vector.multi_reduction <add>, %98, %cst_46 [2] : vector<2x8x8xf32> to vector<2x8xf32>
    %100 = vector.shape_cast %99 : vector<2x8xf32> to vector<2x8x1xf32>
    %101 = tpu.reciprocal %100 {approx = true} : vector<2x8x1xf32> -> vector<2x8x1xf32>
    %102 = vector.broadcast %101 : vector<2x8x1xf32> to vector<2x8x8xf32>
    %103 = arith.mulf %98, %102 : vector<2x8x8xf32>
    %104 = arith.truncf %103 : vector<2x8x8xf32> to vector<2x8x8xbf16>
    %c3 = arith.constant 3 : index
    %c0_47 = arith.constant 0 : index
    %c0_48 = arith.constant 0 : index
    %c0_49 = arith.constant 0 : index
    %105 = vector.load %arg15[%c3, %c0_47, %c0_48, %c0_49] : memref<4x2x8x8xf32, #tpu.memory_space<vmem>>, vector<1x2x8x8xf32>
    %106 = vector.shape_cast %105 : vector<1x2x8x8xf32> to vector<2x8x8xf32>
    %107 = vector.shape_cast %103 : vector<2x8x8xf32> to vector<1x2x8x8xf32>
    tpu.vector_store %arg15[%c3, %c0_47, %c0_48, %c0_49], %107 {strides = array<i32>} : memref<4x2x8x8xf32, #tpu.memory_space<vmem>>, vector<1x2x8x8xf32>,
    "tpu.trace_start"() <{level = 10 : i32, message = "bqk,bke->bqe"}> : () -> ()
    %cst_50 = arith.constant dense<0.000000e+00> : vector<2x8x8xf32>
    %108 = tpu.matmul %104, %92, %cst_50 {dimension_numbers = #tpu.dot_dimension_numbers<[2], [1], [1], [2], [0, 0, 0, 1, 1, 2], [0], [0]>} : vector<2x8x8xbf16>, vector<2x8x8xbf16>, vector<2x8x8xf32> -> vector<2x8x8xf32>
    "tpu.trace_stop"() : () -> ()
    %109 = arith.truncf %108 : vector<2x8x8xf32> to vector<2x8x8xbf16>
    %110 = tpu.concatenate %49, %69, %89, %109 in 2 : vector<2x8x8xbf16>, vector<2x8x8xbf16>, vector<2x8x8xbf16>, vector<2x8x8xbf16> -> vector<2x8x32xbf16>
    %111 = vector.shape_cast %110 : vector<2x8x32xbf16> to vector<16x32xbf16>
    %c0_51 = arith.constant 0 : index
    %c0_52 = arith.constant 0 : index
    %112 = vector.load %arg10[%c0_51, %c0_52] : memref<32x32xbf16, #tpu.memory_space<vmem>>, vector<32x32xbf16>
    %cst_53 = arith.constant dense<0.000000e+00> : vector<16x32xf32>
    %113 = tpu.matmul %111, %112, %cst_53 {dimension_numbers = #tpu.dot_dimension_numbers<[1], [0], [0], [1], [0, 0, 1, 1], [], []>} : vector<16x32xbf16>, vector<32x32xbf16>, vector<16x32xf32> -> vector<16x32xf32>
    %114 = vector.shape_cast %113 : vector<16x32xf32> to vector<2x8x32xf32>
    %c0_54 = arith.constant 0 : index
    %c0_55 = arith.constant 0 : index
    %115 = vector.load %arg11[%c0_54, %c0_55] : memref<1x32xf32, #tpu.memory_space<vmem>>, vector<1x32xf32>
    %116 = vector.shape_cast %115 : vector<1x32xf32> to vector<1x1x32xf32>
    %117 = vector.broadcast %116 : vector<1x1x32xf32> to vector<2x8x32xf32>
    %118 = arith.addf %114, %117 : vector<2x8x32xf32>
    %119 = arith.addf %118, %0 : vector<2x8x32xf32>
    %cst_56 = arith.constant dense<0.000000e+00> : vector<2x8xf32>
    %120 = vector.multi_reduction <add>, %119, %cst_56 [2] : vector<2x8x32xf32> to vector<2x8xf32>
    %121 = vector.shape_cast %120 : vector<2x8xf32> to vector<2x8x1xf32>
    %cst_57 = arith.constant 3.200000e+01 : f32
    %122 = vector.broadcast %cst_57 : f32 to vector<2x8x1xf32>
    %123 = arith.divf %121, %122 : vector<2x8x1xf32>
    %124 = vector.broadcast %123 : vector<2x8x1xf32> to vector<2x8x32xf32>
    %125 = arith.subf %119, %124 : vector<2x8x32xf32>
    %126 = arith.mulf %125, %125 : vector<2x8x32xf32>
    %cst_58 = arith.constant dense<0.000000e+00> : vector<2x8xf32>
    %127 = vector.multi_reduction <add>, %126, %cst_58 [2] : vector<2x8x32xf32> to vector<2x8xf32>
    %128 = vector.shape_cast %127 : vector<2x8xf32> to vector<2x8x1xf32>
    %cst_59 = arith.constant 3.200000e+01 : f32
    %129 = vector.broadcast %cst_59 : f32 to vector<2x8x1xf32>
    %130 = arith.divf %128, %129 : vector<2x8x1xf32>
    %131 = vector.broadcast %123 : vector<2x8x1xf32> to vector<2x8x32xf32>
    %132 = arith.subf %119, %131 : vector<2x8x32xf32>
    %cst_60 = arith.constant 9.99999974E-6 : f32
    %133 = vector.broadcast %cst_60 : f32 to vector<2x8x1xf32>
    %134 = arith.addf %130, %133 : vector<2x8x1xf32>
    %135 = math.rsqrt %134 : vector<2x8x1xf32>
    %136 = vector.broadcast %135 : vector<2x8x1xf32> to vector<2x8x32xf32>
    %137 = arith.mulf %132, %136 : vector<2x8x32xf32>
    %c0_61 = arith.constant 0 : index
    %c0_62 = arith.constant 0 : index
    %138 = vector.load %arg12[%c0_61, %c0_62] : memref<1x32xf32, #tpu.memory_space<vmem>>, vector<1x32xf32>
    %139 = vector.shape_cast %138 : vector<1x32xf32> to vector<1x1x32xf32>
    %140 = vector.broadcast %139 : vector<1x1x32xf32> to vector<2x8x32xf32>
    %141 = arith.mulf %137, %140 : vector<2x8x32xf32>
    %c0_63 = arith.constant 0 : index
    %c0_64 = arith.constant 0 : index
    %142 = vector.load %arg13[%c0_63, %c0_64] : memref<1x32xf32, #tpu.memory_space<vmem>>, vector<1x32xf32>
    %143 = vector.shape_cast %142 : vector<1x32xf32> to vector<1x1x32xf32>
    %144 = vector.broadcast %143 : vector<1x1x32xf32> to vector<2x8x32xf32>
    %145 = arith.addf %141, %144 : vector<2x8x32xf32>
    %c0_65 = arith.constant 0 : index
    %c0_66 = arith.constant 0 : index
    %c0_67 = arith.constant 0 : index
    %146 = vector.load %arg14[%c0_65, %c0_66, %c0_67] : memref<2x8x32xf32, #tpu.memory_space<vmem>>, vector<2x8x32xf32>
    tpu.vector_store %arg14[%c0_65, %c0_66, %c0_67], %145 {strides = array<i32>} : memref<2x8x32xf32, #tpu.memory_space<vmem>>, vector<2x8x32xf32>,
    return
  }
  func.func @transform_0(%arg0: i32) -> (i32, i32, i32) {
    %c0_i32 = arith.constant 0 : i32
    %c0_i32_0 = arith.constant 0 : i32
    %c0_i32_1 = arith.constant 0 : i32
    return %arg0, %c0_i32, %c0_i32_0 : i32, i32, i32
  }
  func.func @transform_1(%arg0: i32) -> (i32, i32, i32) {
    %c0_i32 = arith.constant 0 : i32
    %c0_i32_0 = arith.constant 0 : i32
    %c0_i32_1 = arith.constant 0 : i32
    return %arg0, %c0_i32, %c0_i32_0 : i32, i32, i32
  }
  func.func @transform_2(%arg0: i32) -> (i32, i32, i32) {
    %c0_i32 = arith.constant 0 : i32
    %c0_i32_0 = arith.constant 0 : i32
    %c0_i32_1 = arith.constant 0 : i32
    return %arg0, %c0_i32, %c0_i32_0 : i32, i32, i32
  }
  func.func @transform_3(%arg0: i32) -> (i32, i32) {
    %c0_i32 = arith.constant 0 : i32
    %c0_i32_0 = arith.constant 0 : i32
    %c0_i32_1 = arith.constant 0 : i32
    return %c0_i32, %c0_i32_0 : i32, i32
  }
  func.func @transform_4(%arg0: i32) -> (i32, i32) {
    %c0_i32 = arith.constant 0 : i32
    %c0_i32_0 = arith.constant 0 : i32
    %c0_i32_1 = arith.constant 0 : i32
    return %c0_i32, %c0_i32_0 : i32, i32
  }
  func.func @transform_5(%arg0: i32) -> (i32, i32) {
    %c0_i32 = arith.constant 0 : i32
    %c0_i32_0 = arith.constant 0 : i32
    %c0_i32_1 = arith.constant 0 : i32
    return %c0_i32, %c0_i32_0 : i32, i32
  }
  func.func @transform_6(%arg0: i32) -> (i32, i32) {
    %c0_i32 = arith.constant 0 : i32
    %c0_i32_0 = arith.constant 0 : i32
    %c0_i32_1 = arith.constant 0 : i32
    return %c0_i32, %c0_i32_0 : i32, i32
  }
  func.func @transform_7(%arg0: i32) -> (i32, i32) {
    %c0_i32 = arith.constant 0 : i32
    %c0_i32_0 = arith.constant 0 : i32
    %c0_i32_1 = arith.constant 0 : i32
    return %c0_i32, %c0_i32_0 : i32, i32
  }
  func.func @transform_8(%arg0: i32) -> (i32, i32) {
    %c0_i32 = arith.constant 0 : i32
    %c0_i32_0 = arith.constant 0 : i32
    %c0_i32_1 = arith.constant 0 : i32
    return %c0_i32, %c0_i32_0 : i32, i32
  }
  func.func @transform_9(%arg0: i32) -> (i32, i32) {
    %c0_i32 = arith.constant 0 : i32
    %c0_i32_0 = arith.constant 0 : i32
    %c0_i32_1 = arith.constant 0 : i32
    return %c0_i32, %c0_i32_0 : i32, i32
  }
  func.func @transform_10(%arg0: i32) -> (i32, i32) {
    %c0_i32 = arith.constant 0 : i32
    %c0_i32_0 = arith.constant 0 : i32
    %c0_i32_1 = arith.constant 0 : i32
    return %c0_i32, %c0_i32_0 : i32, i32
  }
  func.func @transform_11(%arg0: i32) -> (i32, i32) {
    %c0_i32 = arith.constant 0 : i32
    %c0_i32_0 = arith.constant 0 : i32
    %c0_i32_1 = arith.constant 0 : i32
    return %c0_i32, %c0_i32_0 : i32, i32
  }
  func.func @transform_12(%arg0: i32) -> (i32, i32) {
    %c0_i32 = arith.constant 0 : i32
    %c0_i32_0 = arith.constant 0 : i32
    %c0_i32_1 = arith.constant 0 : i32
    return %c0_i32, %c0_i32_0 : i32, i32
  }
  func.func @transform_13(%arg0: i32) -> (i32, i32, i32) {
    %c0_i32 = arith.constant 0 : i32
    %c0_i32_0 = arith.constant 0 : i32
    %c0_i32_1 = arith.constant 0 : i32
    return %arg0, %c0_i32, %c0_i32_0 : i32, i32, i32
  }
  func.func @transform_14(%arg0: i32) -> (i32, i32, i32, i32) {
    %c0_i32 = arith.constant 0 : i32
    %c0_i32_0 = arith.constant 0 : i32
    %c0_i32_1 = arith.constant 0 : i32
    %c0_i32_2 = arith.constant 0 : i32
    return %c0_i32, %arg0, %c0_i32_0, %c0_i32_1 : i32, i32, i32, i32
  }
}

</mosaic_0001>

<llo_original>
// kernel: tpu_custom_call.1
$region0: #{tpu_custom_call.1}
  #allocation0 [shape = 'u32[]', space=smem, size = 0x4, offset = 0x4, fixed_abs, tag = 'smem constant byte address 0x4 - core index']
  #allocation1 [shape = 'u32[144,128]{1,0:T(1,128)}', space=vmem, size = 0x12000, scoped, tag = 'internal scratch']
  %s0 = inlined_call_operand.hbm [shape: f32[2,8,32], index: 0, kind: input, shape index: {}]
  %s1 = inlined_call_operand.hbm [shape: f32[2,8,32], index: 1, kind: input, shape index: {}]
  %s2 = inlined_call_operand.hbm [shape: f32[2,8,32], index: 2, kind: input, shape index: {}]
  %s3 = inlined_call_operand.hbm [shape: bf16[32,32], index: 3, kind: input, shape index: {}]
  %s4 = inlined_call_operand.vmem [shape: f32[1,32], index: 4, kind: input, shape index: {}]
  %s5 = inlined_call_operand.vmem [shape: bf16[32,32], index: 5, kind: input, shape index: {}]
  %s6 = inlined_call_operand.vmem [shape: f32[1,32], index: 6, kind: input, shape index: {}]
  %s7 = inlined_call_operand.hbm [shape: bf16[32,32], index: 7, kind: input, shape index: {}]
  %s8 = inlined_call_operand.hbm [shape: f32[1,32], index: 8, kind: input, shape index: {}]
  %s9 = inlined_call_operand.vmem [shape: bf16[32,32], index: 9, kind: input, shape index: {}]
  %s10 = inlined_call_operand.vmem [shape: f32[1,32], index: 10, kind: input, shape index: {}]
  %s11 = inlined_call_operand.vmem [shape: f32[1,32], index: 11, kind: input, shape index: {}]
  %s12 = inlined_call_operand.vmem [shape: f32[1,32], index: 12, kind: input, shape index: {}]
  %s13 = inlined_call_operand.hbm [shape: f32[2,8,32], index: 13, kind: output, shape index: {0}]
  %s14 = inlined_call_operand.hbm [shape: f32[4,2,8,8], index: 14, kind: output, shape index: {1}]
  %15 = xla_tuple %s13, %s14
  %s16 = sld [smem:[#allocation0]]
  $region94: #{tpu_custom_call.1} parent=0
    _
  %s18 = ssub.s32 1, %s16
  %s19 = scalar_select 0, %s18, %s16
  $region1: #{tpu_custom_call.1} parent=0
    #allocation2 [shape = 'u8[8192]{0}', space=vmem, size = 0x2000, scoped, tag = 'input window, operand 0, single buffered']
    #allocation3 [shape = 's32[1]{0}', space=sflag, size = 0x4, scoped, tag = 'scoped memory for tpu_custom_call.1']
    #allocation4 [shape = 's32[1]{0}', space=sflag, size = 0x4, scoped, tag = 'scoped memory for tpu_custom_call.1']
    #allocation5 [shape = 'u8[8192]{0}', space=vmem, size = 0x2000, scoped, tag = 'input window, operand 1, single buffered']
    #allocation6 [shape = 's32[1]{0}', space=sflag, size = 0x4, scoped, tag = 'scoped memory for tpu_custom_call.1']
    #allocation7 [shape = 'u8[8192]{0}', space=vmem, size = 0x2000, scoped, tag = 'input window, operand 2, single buffered']
    #allocation8 [shape = 'u8[8192]{0}', space=vmem, size = 0x2000, scoped, tag = 'input window, operand 3, single buffered']
    #allocation9 [shape = 's32[1]{0}', space=sflag, size = 0x4, scoped, tag = 'scoped memory for tpu_custom_call.1']
    #allocation10 [shape = 'u8[8192]{0}', space=vmem, size = 0x2000, scoped, tag = 'input window, operand 7, single buffered']
    #allocation11 [shape = 'u8[512]{0}', space=vmem, size = 0x400, scoped, tag = 'input window, operand 8, single buffered']
    #allocation12 [shape = 's32[1]{0}', space=sflag, size = 0x4, scoped, tag = 'scoped memory for tpu_custom_call.1']
    #allocation13 [shape = 'u8[8192]{0}', space=vmem, size = 0x2000, scoped, tag = 'output window, operand 0, single buffered']
    #allocation14 [shape = 'u8[32768]{0}', space=vmem, size = 0x8000, scoped, tag = 'output window, operand 1, single buffered']
    #allocation15 [shape = 's32[1]{0}', space=sflag, size = 0x4, scoped, tag = 'scoped memory for tpu_custom_call.1']
    %20 = vsyncpa [#allocation3], 0
    %21 = vsyncpa [#allocation6], 0
    %22 = vsyncpa [#allocation9], 0
    %23 = vsyncpa [#allocation12], 0
    %24 = vsyncpa [#allocation4], 0
    %25 = vsyncpa [#allocation15], 0
    // Predicated region
    $region2: #{tpu_custom_call.1} parent=1 // pred_check
      _
    $region3: #{tpu_custom_call.1} parent=1 // pred_check_branch
      %27 = sbr.rel (0) target = $region5
    $region4: #{tpu_custom_call.1} parent=1 // pred_region
      %s29 = ssub.s32 256, 256
      %30 = vsyncadd [#allocation3], %s29
      %s31 = sshll.u32 [#allocation2], 4
      %s32 = int_to_ptr.vmem [resolvable:$true] %s31
      %37 = dma.hbm_to_vmem [thread:$0]  %s0, 256, %s32, [#allocation3], 128, 128, 8
    $region5: #{tpu_custom_call.1} parent=1 // pred_fallthru
      _
    // Predicated region
    $region6: #{tpu_custom_call.1} parent=1 // pred_check
      _
    $region7: #{tpu_custom_call.1} parent=1 // pred_check_branch
      %39 = sbr.rel (0) target = $region9
    $region8: #{tpu_custom_call.1} parent=1 // pred_region
      %s41 = ssub.s32 256, 256
      %42 = vsyncadd [#allocation6], %s41
      %s43 = sshll.u32 [#allocation5], 4
      %s44 = int_to_ptr.vmem [resolvable:$true] %s43
      %49 = dma.hbm_to_vmem [thread:$0]  %s1, 256, %s44, [#allocation6], 128, 128, 8
    $region9: #{tpu_custom_call.1} parent=1 // pred_fallthru
      _
    // Predicated region
    $region10: #{tpu_custom_call.1} parent=1 // pred_check
      _
    $region11: #{tpu_custom_call.1} parent=1 // pred_check_branch
      %51 = sbr.rel (0) target = $region13
    $region12: #{tpu_custom_call.1} parent=1 // pred_region
      %s53 = ssub.s32 256, 256
      %54 = vsyncadd [#allocation6], %s53
      %s55 = sshll.u32 [#allocation7], 4
      %s56 = int_to_ptr.vmem [resolvable:$true] %s55
      %61 = dma.hbm_to_vmem [thread:$0]  %s2, 256, %s56, [#allocation6], 128, 128, 8
    $region13: #{tpu_custom_call.1} parent=1 // pred_fallthru
      _
    // Predicated region
    $region14: #{tpu_custom_call.1} parent=1 // pred_check
      _
    $region15: #{tpu_custom_call.1} parent=1 // pred_check_branch
      %63 = sbr.rel (0) target = $region17
    $region16: #{tpu_custom_call.1} parent=1 // pred_region
      %s65 = ssub.s32 256, 256
      %66 = vsyncadd [#allocation9], %s65
      %s67 = sshll.u32 [#allocation8], 4
      %s68 = int_to_ptr.vmem [resolvable:$true] %s67
      %73 = dma.hbm_to_vmem [thread:$0]  %s3, 256, %s68, [#allocation9], 64, 64, 4
    $region17: #{tpu_custom_call.1} parent=1 // pred_fallthru
      _
    // Predicated region
    $region18: #{tpu_custom_call.1} parent=1 // pred_check
      _
    $region19: #{tpu_custom_call.1} parent=1 // pred_check_branch
      %75 = sbr.rel (0) target = $region21
    $region20: #{tpu_custom_call.1} parent=1 // pred_region
      _
    $region21: #{tpu_custom_call.1} parent=1 // pred_fallthru
      _
    // Predicated region
    $region22: #{tpu_custom_call.1} parent=1 // pred_check
      _
    $region23: #{tpu_custom_call.1} parent=1 // pred_check_branch
      %77 = sbr.rel (0) target = $region25
    $region24: #{tpu_custom_call.1} parent=1 // pred_region
      _
    $region25: #{tpu_custom_call.1} parent=1 // pred_fallthru
      _
    // Predicated region
    $region26: #{tpu_custom_call.1} parent=1 // pred_check
      _
    $region27: #{tpu_custom_call.1} parent=1 // pred_check_branch
      %79 = sbr.rel (0) target = $region29
    $region28: #{tpu_custom_call.1} parent=1 // pred_region
      _
    $region29: #{tpu_custom_call.1} parent=1 // pred_fallthru
      _
    // Predicated region
    $region30: #{tpu_custom_call.1} parent=1 // pred_check
      _
    $region31: #{tpu_custom_call.1} parent=1 // pred_check_branch
      %81 = sbr.rel (0) target = $region33
    $region32: #{tpu_custom_call.1} parent=1 // pred_region
      %s83 = ssub.s32 256, 256
      %84 = vsyncadd [#allocation9], %s83
      %s85 = sshll.u32 [#allocation10], 4
      %s86 = int_to_ptr.vmem [resolvable:$true] %s85
      %91 = dma.hbm_to_vmem [thread:$0]  %s7, 256, %s86, [#allocation9], 64, 64, 4
    $region33: #{tpu_custom_call.1} parent=1 // pred_fallthru
      _
    // Predicated region
    $region34: #{tpu_custom_call.1} parent=1 // pred_check
      _
    $region35: #{tpu_custom_call.1} parent=1 // pred_check_branch
      %93 = sbr.rel (0) target = $region37
    $region36: #{tpu_custom_call.1} parent=1 // pred_region
      %s95 = ssub.s32 16, 16
      %96 = vsyncadd [#allocation12], %s95
      %s98 = sshll.u32 [#allocation11], 4
      %s99 = int_to_ptr.vmem [resolvable:$true] %s98
      %101 = dma.hbm_to_vmem [thread:$0]  %s8, 16, %s99, [#allocation12]
    $region37: #{tpu_custom_call.1} parent=1 // pred_fallthru
      _
    // Predicated region
    $region38: #{tpu_custom_call.1} parent=1 // pred_check
      _
    $region39: #{tpu_custom_call.1} parent=1 // pred_check_branch
      %103 = sbr.rel (0) target = $region41
    $region40: #{tpu_custom_call.1} parent=1 // pred_region
      _
    $region41: #{tpu_custom_call.1} parent=1 // pred_fallthru
      _
    // Predicated region
    $region42: #{tpu_custom_call.1} parent=1 // pred_check
      _
    $region43: #{tpu_custom_call.1} parent=1 // pred_check_branch
      %105 = sbr.rel (0) target = $region45
    $region44: #{tpu_custom_call.1} parent=1 // pred_region
      _
    $region45: #{tpu_custom_call.1} parent=1 // pred_fallthru
      _
    // Predicated region
    $region46: #{tpu_custom_call.1} parent=1 // pred_check
      _
    $region47: #{tpu_custom_call.1} parent=1 // pred_check_branch
      %107 = sbr.rel (0) target = $region49
    $region48: #{tpu_custom_call.1} parent=1 // pred_region
      _
    $region49: #{tpu_custom_call.1} parent=1 // pred_fallthru
      _
    // Predicated region
    $region50: #{tpu_custom_call.1} parent=1 // pred_check
      _
    $region51: #{tpu_custom_call.1} parent=1 // pred_check_branch
      %109 = sbr.rel (0) target = $region53
    $region52: #{tpu_custom_call.1} parent=1 // pred_region
      _
    $region53: #{tpu_custom_call.1} parent=1 // pred_fallthru
      _
    // Predicated region
    $region54: #{tpu_custom_call.1} parent=1 // pred_check
      _
    $region55: #{tpu_custom_call.1} parent=1 // pred_check_branch
      %111 = sbr.rel (0) target = $region57
    $region56: #{tpu_custom_call.1} parent=1 // pred_region
      %112 = dma.done [#allocation3], 256
    $region57: #{tpu_custom_call.1} parent=1 // pred_fallthru
      _
    // Predicated region
    $region58: #{tpu_custom_call.1} parent=1 // pred_check
      _
    $region59: #{tpu_custom_call.1} parent=1 // pred_check_branch
      %114 = sbr.rel (0) target = $region61
    $region60: #{tpu_custom_call.1} parent=1 // pred_region
      %115 = dma.done [#allocation6], 256
    $region61: #{tpu_custom_call.1} parent=1 // pred_fallthru
      _
    // Predicated region
    $region62: #{tpu_custom_call.1} parent=1 // pred_check
      _
    $region63: #{tpu_custom_call.1} parent=1 // pred_check_branch
      %117 = sbr.rel (0) target = $region65
    $region64: #{tpu_custom_call.1} parent=1 // pred_region
      %118 = dma.done [#allocation6], 256
    $region65: #{tpu_custom_call.1} parent=1 // pred_fallthru
      _
    // Predicated region
    $region66: #{tpu_custom_call.1} parent=1 // pred_check
      _
    $region67: #{tpu_custom_call.1} parent=1 // pred_check_branch
      %120 = sbr.rel (0) target = $region69
    $region68: #{tpu_custom_call.1} parent=1 // pred_region
      %121 = dma.done [#allocation9], 256
    $region69: #{tpu_custom_call.1} parent=1 // pred_fallthru
      _
    // Predicated region
    $region70: #{tpu_custom_call.1} parent=1 // pred_check
      _
    $region71: #{tpu_custom_call.1} parent=1 // pred_check_branch
      %123 = sbr.rel (0) target = $region73
    $region72: #{tpu_custom_call.1} parent=1 // pred_region
      %124 = dma.done [#allocation9], 256
    $region73: #{tpu_custom_call.1} parent=1 // pred_fallthru
      _
    // Predicated region
    $region74: #{tpu_custom_call.1} parent=1 // pred_check
      _
    $region75: #{tpu_custom_call.1} parent=1 // pred_check_branch
      %126 = sbr.rel (0) target = $region77
    $region76: #{tpu_custom_call.1} parent=1 // pred_region
      %127 = dma.done [#allocation12], 16
    $region77: #{tpu_custom_call.1} parent=1 // pred_fallthru
      _
    %v129 = vld [vmem:[#allocation2] sm:$0xff]
    %v130 = vld [vmem:[#allocation2 + $0x8] sm:$0xff]
    %v131 = vld [vmem:[#allocation5] sm:$0xff]
    %v132 = vld [vmem:[#allocation5 + $0x8] sm:$0xff]
    %v133 = vld [vmem:[#allocation7] sm:$0xff]
    %v134 = vld [vmem:[#allocation7 + $0x8] sm:$0xff]
    %v135 = vpack.c.bf16 %v130, %v129
    %v136 = vpack.c.bf16 %v132, %v131
    %v137 = vpack.c.bf16 %v134, %v133
    %v138 = vld [vmem:[#allocation8] sm:$0xf]
    %v139 = vld [vmem:[#allocation8 + $0x4] sm:$0xf]
    %v140 = vld [vmem:[#allocation8 + $0x8] sm:$0xf]
    %v141 = vld [vmem:[#allocation8 + $0xc] sm:$0xf]
    %v142 = vld [vmem:[%s4] sm:$0x1]
    %v144 = vlaneseq
    %v145 = vshrl.u32 %v144, 7
    %v146 = vsub.s32 0, %v145
    %v147 = vrot.slane %v142, %v146
    %v153 = vunpack.c.l.b16 %v138
    %v154 = vunpack.c.l.b16 %v139
    %v155 = vunpack.c.l.b16 %v140
    %v156 = vunpack.c.l.b16 %v141
    %v157 = vpack.c.b16 %v154, %v153
    %v158 = vpack.c.b16 %v156, %v155
    %vm161 = vcmask 261120
    %v163 = vsel %vm161, %v135, 0
    %165 = vmatprep.subr.bf16.mxu0 0
    %166 = vmatpush1.bf16.msra.mxu0 %v157
    %167 = vmatprep.subr.bf16.mxu0 0
    %168 = vmatpush1.bf16.msra.mxu0 %v158
    %169 = vmatprep.subr.bf16.mxu0 0
    %170 = vmatpush1.bf16.msra.mxu0 0
    %171 = vmatprep.subr.bf16.mxu0 0
    %172 = vmatpush1.bf16.msra.mxu0 0
    %173 = vmatprep.subr.bf16.mxu0 0
    %174 = vmatpush1.bf16.msra.mxu0 0
    %175 = vmatprep.subr.bf16.mxu0 0
    %176 = vmatpush1.bf16.msra.mxu0 0
    %177 = vmatprep.subr.bf16.mxu0 0
    %178 = vmatpush1.bf16.msra.mxu0 0
    %179 = vmatprep.subr.bf16.mxu0 0
    %180 = vmatpush1.bf16.msra.mxu0 0
    %181 = vmatprep.subr.bf16.mxu0 0
    %182 = vmatpush1.bf16.msra.mxu0 0
    %183 = vmatprep.subr.bf16.mxu0 0
    %184 = vmatpush1.bf16.msra.mxu0 0
    %185 = vmatprep.subr.bf16.mxu0 0
    %186 = vmatpush1.bf16.msra.mxu0 0
    %187 = vmatprep.subr.bf16.mxu0 0
    %188 = vmatpush1.bf16.msra.mxu0 0
    %189 = vmatprep.subr.bf16.mxu0 0
    %190 = vmatpush1.bf16.msra.mxu0 0
    %191 = vmatprep.subr.bf16.mxu0 0
    %192 = vmatpush1.bf16.msra.mxu0 0
    %193 = vmatprep.subr.bf16.mxu0 0
    %194 = vmatpush1.bf16.msra.mxu0 0
    %195 = vmatprep.subr.bf16.mxu0 0
    %196 = vmatpush1.bf16.msra.mxu0 0
    %197 = vmatprep.mubr.bf16.mxu0 0
    %198 = vmatmul.mubr.bf16.gmra.mrb[0].mxu0 %v163
    %v199 = vpop.f32.mrb[0].mxu0
    %v200 = vadd.f32 %v147, %v199
    %v201 = vpop.f32.mrb[0].mxu0
    %v202 = vpop.f32.mrb[0].mxu0
    %v203 = vadd.f32 %v147, %v202
    %v204 = vpop.f32.mrb[0].mxu0
    %205 = vdwg.mxu0
    %v206 = vld [vmem:[%s5] sm:$0xf]
    %v207 = vld [vmem:[%s5 + $0x4] sm:$0xf]
    %v208 = vld [vmem:[%s5 + $0x8] sm:$0xf]
    %v209 = vld [vmem:[%s5 + $0xc] sm:$0xf]
    %v210 = vld [vmem:[%s6] sm:$0x1]
    %v212 = vlaneseq
    %v213 = vshrl.u32 %v212, 7
    %v214 = vsub.s32 0, %v213
    %v215 = vrot.slane %v210, %v214
    %v221 = vunpack.c.l.b16 %v206
    %v222 = vunpack.c.l.b16 %v207
    %v223 = vunpack.c.l.b16 %v208
    %v224 = vunpack.c.l.b16 %v209
    %v225 = vpack.c.b16 %v222, %v221
    %v226 = vpack.c.b16 %v224, %v223
    %v230 = vsel %vm161, %v136, 0
    %232 = vmatprep.subr.bf16.mxu0 0
    %233 = vmatpush1.bf16.msra.mxu0 %v225
    %234 = vmatprep.subr.bf16.mxu0 0
    %235 = vmatpush1.bf16.msra.mxu0 %v226
    %236 = vmatprep.subr.bf16.mxu0 0
    %237 = vmatpush1.bf16.msra.mxu0 0
    %238 = vmatprep.subr.bf16.mxu0 0
    %239 = vmatpush1.bf16.msra.mxu0 0
    %240 = vmatprep.subr.bf16.mxu0 0
    %241 = vmatpush1.bf16.msra.mxu0 0
    %242 = vmatprep.subr.bf16.mxu0 0
    %243 = vmatpush1.bf16.msra.mxu0 0
    %244 = vmatprep.subr.bf16.mxu0 0
    %245 = vmatpush1.bf16.msra.mxu0 0
    %246 = vmatprep.subr.bf16.mxu0 0
    %247 = vmatpush1.bf16.msra.mxu0 0
    %248 = vmatprep.subr.bf16.mxu0 0
    %249 = vmatpush1.bf16.msra.mxu0 0
    %250 = vmatprep.subr.bf16.mxu0 0
    %251 = vmatpush1.bf16.msra.mxu0 0
    %252 = vmatprep.subr.bf16.mxu0 0
    %253 = vmatpush1.bf16.msra.mxu0 0
    %254 = vmatprep.subr.bf16.mxu0 0
    %255 = vmatpush1.bf16.msra.mxu0 0
    %256 = vmatprep.subr.bf16.mxu0 0
    %257 = vmatpush1.bf16.msra.mxu0 0
    %258 = vmatprep.subr.bf16.mxu0 0
    %259 = vmatpush1.bf16.msra.mxu0 0
    %260 = vmatprep.subr.bf16.mxu0 0
    %261 = vmatpush1.bf16.msra.mxu0 0
    %262 = vmatprep.subr.bf16.mxu0 0
    %263 = vmatpush1.bf16.msra.mxu0 0
    %264 = vmatprep.mubr.bf16.mxu0 0
    %265 = vmatmul.mubr.bf16.gmra.mrb[0].mxu0 %v230
    %v266 = vpop.f32.mrb[0].mxu0
    %v267 = vadd.f32 %v215, %v266
    %v268 = vpop.f32.mrb[0].mxu0
    %v269 = vpop.f32.mrb[0].mxu0
    %v270 = vadd.f32 %v215, %v269
    %v271 = vpop.f32.mrb[0].mxu0
    %272 = vdwg.mxu0
    %v273 = vld [vmem:[#allocation10] sm:$0xf]
    %v274 = vld [vmem:[#allocation10 + $0x4] sm:$0xf]
    %v275 = vld [vmem:[#allocation10 + $0x8] sm:$0xf]
    %v276 = vld [vmem:[#allocation10 + $0xc] sm:$0xf]
    %v277 = vld [vmem:[#allocation11] sm:$0x1]
    %v279 = vlaneseq
    %v280 = vshrl.u32 %v279, 7
    %v281 = vsub.s32 0, %v280
    %v282 = vrot.slane %v277, %v281
    %v288 = vunpack.c.l.b16 %v273
    %v289 = vunpack.c.l.b16 %v274
    %v290 = vunpack.c.l.b16 %v275
    %v291 = vunpack.c.l.b16 %v276
    %v292 = vpack.c.b16 %v289, %v288
    %v293 = vpack.c.b16 %v291, %v290
    %v297 = vsel %vm161, %v137, 0
    %299 = vmatprep.subr.bf16.mxu0 0
    %300 = vmatpush1.bf16.msra.mxu0 %v292
    %301 = vmatprep.subr.bf16.mxu0 0
    %302 = vmatpush1.bf16.msra.mxu0 %v293
    %303 = vmatprep.subr.bf16.mxu0 0
    %304 = vmatpush1.bf16.msra.mxu0 0
    %305 = vmatprep.subr.bf16.mxu0 0
    %306 = vmatpush1.bf16.msra.mxu0 0
    %307 = vmatprep.subr.bf16.mxu0 0
    %308 = vmatpush1.bf16.msra.mxu0 0
    %309 = vmatprep.subr.bf16.mxu0 0
    %310 = vmatpush1.bf16.msra.mxu0 0
    %311 = vmatprep.subr.bf16.mxu0 0
    %312 = vmatpush1.bf16.msra.mxu0 0
    %313 = vmatprep.subr.bf16.mxu0 0
    %314 = vmatpush1.bf16.msra.mxu0 0
    %315 = vmatprep.subr.bf16.mxu0 0
    %316 = vmatpush1.bf16.msra.mxu0 0
    %317 = vmatprep.subr.bf16.mxu0 0
    %318 = vmatpush1.bf16.msra.mxu0 0
    %319 = vmatprep.subr.bf16.mxu0 0
    %320 = vmatpush1.bf16.msra.mxu0 0
    %321 = vmatprep.subr.bf16.mxu0 0
    %322 = vmatpush1.bf16.msra.mxu0 0
    %323 = vmatprep.subr.bf16.mxu0 0
    %324 = vmatpush1.bf16.msra.mxu0 0
    %325 = vmatprep.subr.bf16.mxu0 0
    %326 = vmatpush1.bf16.msra.mxu0 0
    %327 = vmatprep.subr.bf16.mxu0 0
    %328 = vmatpush1.bf16.msra.mxu0 0
    %329 = vmatprep.subr.bf16.mxu0 0
    %330 = vmatpush1.bf16.msra.mxu0 0
    %331 = vmatprep.mubr.bf16.mxu0 0
    %332 = vmatmul.mubr.bf16.gmra.mrb[0].mxu0 %v297
    %v333 = vpop.f32.mrb[0].mxu0
    %v334 = vadd.f32 %v282, %v333
    %v335 = vpop.f32.mrb[0].mxu0
    %v336 = vpop.f32.mrb[0].mxu0
    %v337 = vadd.f32 %v282, %v336
    %v338 = vpop.f32.mrb[0].mxu0
    %339 = vdwg.mxu0
    %v340 = vpack.c.bf16 %v200, %v200
    %v341 = vpack.c.bf16 %v203, %v203
    %v342 = vpack.c.bf16 %v267, %v267
    %v343 = vpack.c.bf16 %v270, %v270
    %v344 = vpack.c.bf16 %v334, %v334
    %v345 = vpack.c.bf16 %v337, %v337
    %vm346 = vcmask 64512
    %v348 = vsel %vm346, %v340, 0
    %v351 = vsel %vm346, %v342, 0
    %353 = vmatprep.subr.bf16.mxu0 0
    %354 = vmatpush1.bf16.xpose.msra.mxu0 %v351
    %355 = vmatprep.subr.bf16.mxu0 0
    %356 = vmatpush1.bf16.xpose.msra.mxu0 0
    %357 = vmatprep.subr.bf16.mxu0 0
    %358 = vmatpush1.bf16.xpose.msra.mxu0 0
    %359 = vmatprep.subr.bf16.mxu0 0
    %360 = vmatpush1.bf16.xpose.msra.mxu0 0
    %361 = vmatprep.subr.bf16.mxu0 0
    %362 = vmatpush1.bf16.xpose.msra.mxu0 0
    %363 = vmatprep.subr.bf16.mxu0 0
    %364 = vmatpush1.bf16.xpose.msra.mxu0 0
    %365 = vmatprep.subr.bf16.mxu0 0
    %366 = vmatpush1.bf16.xpose.msra.mxu0 0
    %367 = vmatprep.subr.bf16.mxu0 0
    %368 = vmatpush1.bf16.xpose.msra.mxu0 0
    %369 = vmatprep.subr.bf16.mxu0 0
    %370 = vmatpush1.bf16.xpose.msra.mxu0 0
    %371 = vmatprep.subr.bf16.mxu0 0
    %372 = vmatpush1.bf16.xpose.msra.mxu0 0
    %373 = vmatprep.subr.bf16.mxu0 0
    %374 = vmatpush1.bf16.xpose.msra.mxu0 0
    %375 = vmatprep.subr.bf16.mxu0 0
    %376 = vmatpush1.bf16.xpose.msra.mxu0 0
    %377 = vmatprep.subr.bf16.mxu0 0
    %378 = vmatpush1.bf16.xpose.msra.mxu0 0
    %379 = vmatprep.subr.bf16.mxu0 0
    %380 = vmatpush1.bf16.xpose.msra.mxu0 0
    %381 = vmatprep.subr.bf16.mxu0 0
    %382 = vmatpush1.bf16.xpose.msra.mxu0 0
    %383 = vmatprep.subr.bf16.mxu0 0
    %384 = vmatpush1.bf16.xpose.msra.mxu0 0
    %385 = vmatprep.mubr.bf16.mxu0 0
    %386 = vmatmul.mubr.bf16.gmra.mrb[0].mxu0 %v348
    %v387 = vpop.f32.mrb[0].mxu0
    %v388 = vadd.f32 0.0, %v387
    %v389 = vpop.f32.mrb[0].mxu0
    %v390 = vpop.f32.mrb[0].mxu0
    %v391 = vpop.f32.mrb[0].mxu0
    %392 = vdwg.mxu0
    %v394 = vsel %vm346, %v341, 0
    %v397 = vsel %vm346, %v343, 0
    %399 = vmatprep.subr.bf16.mxu0 0
    %400 = vmatpush1.bf16.xpose.msra.mxu0 %v397
    %401 = vmatprep.subr.bf16.mxu0 0
    %402 = vmatpush1.bf16.xpose.msra.mxu0 0
    %403 = vmatprep.subr.bf16.mxu0 0
    %404 = vmatpush1.bf16.xpose.msra.mxu0 0
    %405 = vmatprep.subr.bf16.mxu0 0
    %406 = vmatpush1.bf16.xpose.msra.mxu0 0
    %407 = vmatprep.subr.bf16.mxu0 0
    %408 = vmatpush1.bf16.xpose.msra.mxu0 0
    %409 = vmatprep.subr.bf16.mxu0 0
    %410 = vmatpush1.bf16.xpose.msra.mxu0 0
    %411 = vmatprep.subr.bf16.mxu0 0
    %412 = vmatpush1.bf16.xpose.msra.mxu0 0
    %413 = vmatprep.subr.bf16.mxu0 0
    %414 = vmatpush1.bf16.xpose.msra.mxu0 0
    %415 = vmatprep.subr.bf16.mxu0 0
    %416 = vmatpush1.bf16.xpose.msra.mxu0 0
    %417 = vmatprep.subr.bf16.mxu0 0
    %418 = vmatpush1.bf16.xpose.msra.mxu0 0
    %419 = vmatprep.subr.bf16.mxu0 0
    %420 = vmatpush1.bf16.xpose.msra.mxu0 0
    %421 = vmatprep.subr.bf16.mxu0 0
    %422 = vmatpush1.bf16.xpose.msra.mxu0 0
    %423 = vmatprep.subr.bf16.mxu0 0
    %424 = vmatpush1.bf16.xpose.msra.mxu0 0
    %425 = vmatprep.subr.bf16.mxu0 0
    %426 = vmatpush1.bf16.xpose.msra.mxu0 0
    %427 = vmatprep.subr.bf16.mxu0 0
    %428 = vmatpush1.bf16.xpose.msra.mxu0 0
    %429 = vmatprep.subr.bf16.mxu0 0
    %430 = vmatpush1.bf16.xpose.msra.mxu0 0
    %431 = vmatprep.mubr.bf16.mxu0 0
    %432 = vmatmul.mubr.bf16.gmra.mrb[0].mxu0 %v394
    %v433 = vpop.f32.mrb[0].mxu0
    %v434 = vadd.f32 0.0, %v433
    %v435 = vpop.f32.mrb[0].mxu0
    %v436 = vpop.f32.mrb[0].mxu0
    %v437 = vpop.f32.mrb[0].mxu0
    %438 = vdwg.mxu0
    %v439 = vsel %vm346, %v388, -inf
    %440 = vmax.xlane.f32.xlu0 %v439
    %v441 = vpop.xlane.xlu0 %440
    %v442 = vsel %vm346, %v434, -inf
    %443 = vmax.xlane.f32.xlu0 %v442
    %v444 = vpop.xlane.xlu0 %443
    %v445 = vsub.f32 %v388, %v441
    %v446 = vsub.f32 %v434, %v444
    %v447 = vmul.f32 %v445, 1.442695
    %v448 = vpow.pop %v447
    %v449 = vmul.f32 %v446, 1.442695
    %v450 = vpow.pop %v449
    %v451 = vsel %vm346, %v448, 0.0
    %452 = vadd.xlane.f32.xlu0 %v451
    %v453 = vpop.xlane.xlu0 %452
    %v454 = vsel %vm346, %v450, 0.0
    %455 = vadd.xlane.f32.xlu0 %v454
    %v456 = vpop.xlane.xlu0 %455
    %v457 = vrcp.pop %v453
    %v458 = vrcp.pop %v456
    %v459 = vmul.f32 %v448, %v457
    %v460 = vmul.f32 %v450, %v458
    %v461 = vpack.c.bf16 %v459, %v459
    %v462 = vpack.c.bf16 %v460, %v460
    %463 = vst.msk [vmem:[#allocation14] sm:$0xff] %vm346, %v459
    %464 = vst.msk [vmem:[#allocation14 + $0x8] sm:$0xff] %vm346, %v460
    %v466 = vsel %vm346, %v461, 0
    %vm468 = vcmask 1043456
    %v470 = vsel %vm468, %v344, 0
    %472 = vmatprep.subr.bf16.mxu0 0
    %473 = vmatpush1.bf16.msra.mxu0 %v470
    %474 = vmatprep.subr.bf16.mxu0 0
    %475 = vmatpush1.bf16.msra.mxu0 0
    %476 = vmatprep.subr.bf16.mxu0 0
    %477 = vmatpush1.bf16.msra.mxu0 0
    %478 = vmatprep.subr.bf16.mxu0 0
    %479 = vmatpush1.bf16.msra.mxu0 0
    %480 = vmatprep.subr.bf16.mxu0 0
    %481 = vmatpush1.bf16.msra.mxu0 0
    %482 = vmatprep.subr.bf16.mxu0 0
    %483 = vmatpush1.bf16.msra.mxu0 0
    %484 = vmatprep.subr.bf16.mxu0 0
    %485 = vmatpush1.bf16.msra.mxu0 0
    %486 = vmatprep.subr.bf16.mxu0 0
    %487 = vmatpush1.bf16.msra.mxu0 0
    %488 = vmatprep.subr.bf16.mxu0 0
    %489 = vmatpush1.bf16.msra.mxu0 0
    %490 = vmatprep.subr.bf16.mxu0 0
    %491 = vmatpush1.bf16.msra.mxu0 0
    %492 = vmatprep.subr.bf16.mxu0 0
    %493 = vmatpush1.bf16.msra.mxu0 0
    %494 = vmatprep.subr.bf16.mxu0 0
    %495 = vmatpush1.bf16.msra.mxu0 0
    %496 = vmatprep.subr.bf16.mxu0 0
    %497 = vmatpush1.bf16.msra.mxu0 0
    %498 = vmatprep.subr.bf16.mxu0 0
    %499 = vmatpush1.bf16.msra.mxu0 0
    %500 = vmatprep.subr.bf16.mxu0 0
    %501 = vmatpush1.bf16.msra.mxu0 0
    %502 = vmatprep.subr.bf16.mxu0 0
    %503 = vmatpush1.bf16.msra.mxu0 0
    %504 = vmatprep.mubr.bf16.mxu0 0
    %505 = vmatmul.mubr.bf16.gmra.mrb[0].mxu0 %v466
    %v506 = vpop.f32.mrb[0].mxu0
    %v507 = vadd.f32 0.0, %v506
    %v508 = vpop.f32.mrb[0].mxu0
    %v509 = vpop.f32.mrb[0].mxu0
    %v510 = vpop.f32.mrb[0].mxu0
    %511 = vdwg.mxu0
    %v513 = vsel %vm346, %v462, 0
    %v516 = vsel %vm468, %v345, 0
    %518 = vmatprep.subr.bf16.mxu0 0
    %519 = vmatpush1.bf16.msra.mxu0 %v516
    %520 = vmatprep.subr.bf16.mxu0 0
    %521 = vmatpush1.bf16.msra.mxu0 0
    %522 = vmatprep.subr.bf16.mxu0 0
    %523 = vmatpush1.bf16.msra.mxu0 0
    %524 = vmatprep.subr.bf16.mxu0 0
    %525 = vmatpush1.bf16.msra.mxu0 0
    %526 = vmatprep.subr.bf16.mxu0 0
    %527 = vmatpush1.bf16.msra.mxu0 0
    %528 = vmatprep.subr.bf16.mxu0 0
    %529 = vmatpush1.bf16.msra.mxu0 0
    %530 = vmatprep.subr.bf16.mxu0 0
    %531 = vmatpush1.bf16.msra.mxu0 0
    %532 = vmatprep.subr.bf16.mxu0 0
    %533 = vmatpush1.bf16.msra.mxu0 0
    %534 = vmatprep.subr.bf16.mxu0 0
    %535 = vmatpush1.bf16.msra.mxu0 0
    %536 = vmatprep.subr.bf16.mxu0 0
    %537 = vmatpush1.bf16.msra.mxu0 0
    %538 = vmatprep.subr.bf16.mxu0 0
    %539 = vmatpush1.bf16.msra.mxu0 0
    %540 = vmatprep.subr.bf16.mxu0 0
    %541 = vmatpush1.bf16.msra.mxu0 0
    %542 = vmatprep.subr.bf16.mxu0 0
    %543 = vmatpush1.bf16.msra.mxu0 0
    %544 = vmatprep.subr.bf16.mxu0 0
    %545 = vmatpush1.bf16.msra.mxu0 0
    %546 = vmatprep.subr.bf16.mxu0 0
    %547 = vmatpush1.bf16.msra.mxu0 0
    %548 = vmatprep.subr.bf16.mxu0 0
    %549 = vmatpush1.bf16.msra.mxu0 0
    %550 = vmatprep.mubr.bf16.mxu0 0
    %551 = vmatmul.mubr.bf16.gmra.mrb[0].mxu0 %v513
    %v552 = vpop.f32.mrb[0].mxu0
    %v553 = vadd.f32 0.0, %v552
    %v554 = vpop.f32.mrb[0].mxu0
    %v555 = vpop.f32.mrb[0].mxu0
    %v556 = vpop.f32.mrb[0].mxu0
    %557 = vdwg.mxu0
    %v558 = vpack.c.bf16 %v507, %v507
    %v559 = vpack.c.bf16 %v553, %v553
    %561 = vrot.lane.b32.xlu0 %v340, 120
    %v562 = vpop.permute.xlu0 %561
    %564 = vrot.lane.b32.xlu0 %v342, 120
    %v565 = vpop.permute.xlu0 %564
    %v567 = vsel %vm346, %v562, 0
    %v570 = vsel %vm346, %v565, 0
    %572 = vmatprep.subr.bf16.mxu0 0
    %573 = vmatpush1.bf16.xpose.msra.mxu0 %v570
    %574 = vmatprep.subr.bf16.mxu0 0
    %575 = vmatpush1.bf16.xpose.msra.mxu0 0
    %576 = vmatprep.subr.bf16.mxu0 0
    %577 = vmatpush1.bf16.xpose.msra.mxu0 0
    %578 = vmatprep.subr.bf16.mxu0 0
    %579 = vmatpush1.bf16.xpose.msra.mxu0 0
    %580 = vmatprep.subr.bf16.mxu0 0
    %581 = vmatpush1.bf16.xpose.msra.mxu0 0
    %582 = vmatprep.subr.bf16.mxu0 0
    %583 = vmatpush1.bf16.xpose.msra.mxu0 0
    %584 = vmatprep.subr.bf16.mxu0 0
    %585 = vmatpush1.bf16.xpose.msra.mxu0 0
    %586 = vmatprep.subr.bf16.mxu0 0
    %587 = vmatpush1.bf16.xpose.msra.mxu0 0
    %588 = vmatprep.subr.bf16.mxu0 0
    %589 = vmatpush1.bf16.xpose.msra.mxu0 0
    %590 = vmatprep.subr.bf16.mxu0 0
    %591 = vmatpush1.bf16.xpose.msra.mxu0 0
    %592 = vmatprep.subr.bf16.mxu0 0
    %593 = vmatpush1.bf16.xpose.msra.mxu0 0
    %594 = vmatprep.subr.bf16.mxu0 0
    %595 = vmatpush1.bf16.xpose.msra.mxu0 0
    %596 = vmatprep.subr.bf16.mxu0 0
    %597 = vmatpush1.bf16.xpose.msra.mxu0 0
    %598 = vmatprep.subr.bf16.mxu0 0
    %599 = vmatpush1.bf16.xpose.msra.mxu0 0
    %600 = vmatprep.subr.bf16.mxu0 0
    %601 = vmatpush1.bf16.xpose.msra.mxu0 0
    %602 = vmatprep.subr.bf16.mxu0 0
    %603 = vmatpush1.bf16.xpose.msra.mxu0 0
    %604 = vmatprep.mubr.bf16.mxu0 0
    %605 = vmatmul.mubr.bf16.gmra.mrb[0].mxu0 %v567
    %v606 = vpop.f32.mrb[0].mxu0
    %v607 = vadd.f32 0.0, %v606
    %v608 = vpop.f32.mrb[0].mxu0
    %v609 = vpop.f32.mrb[0].mxu0
    %v610 = vpop.f32.mrb[0].mxu0
    %611 = vdwg.mxu0
    %613 = vrot.lane.b32.xlu0 %v341, 120
    %v614 = vpop.permute.xlu0 %613
    %616 = vrot.lane.b32.xlu0 %v343, 120
    %v617 = vpop.permute.xlu0 %616
    %v619 = vsel %vm346, %v614, 0
    %v622 = vsel %vm346, %v617, 0
    %624 = vmatprep.subr.bf16.mxu0 0
    %625 = vmatpush1.bf16.xpose.msra.mxu0 %v622
    %626 = vmatprep.subr.bf16.mxu0 0
    %627 = vmatpush1.bf16.xpose.msra.mxu0 0
    %628 = vmatprep.subr.bf16.mxu0 0
    %629 = vmatpush1.bf16.xpose.msra.mxu0 0
    %630 = vmatprep.subr.bf16.mxu0 0
    %631 = vmatpush1.bf16.xpose.msra.mxu0 0
    %632 = vmatprep.subr.bf16.mxu0 0
    %633 = vmatpush1.bf16.xpose.msra.mxu0 0
    %634 = vmatprep.subr.bf16.mxu0 0
    %635 = vmatpush1.bf16.xpose.msra.mxu0 0
    %636 = vmatprep.subr.bf16.mxu0 0
    %637 = vmatpush1.bf16.xpose.msra.mxu0 0
    %638 = vmatprep.subr.bf16.mxu0 0
    %639 = vmatpush1.bf16.xpose.msra.mxu0 0
    %640 = vmatprep.subr.bf16.mxu0 0
    %641 = vmatpush1.bf16.xpose.msra.mxu0 0
    %642 = vmatprep.subr.bf16.mxu0 0
    %643 = vmatpush1.bf16.xpose.msra.mxu0 0
    %644 = vmatprep.subr.bf16.mxu0 0
    %645 = vmatpush1.bf16.xpose.msra.mxu0 0
    %646 = vmatprep.subr.bf16.mxu0 0
    %647 = vmatpush1.bf16.xpose.msra.mxu0 0
    %648 = vmatprep.subr.bf16.mxu0 0
    %649 = vmatpush1.bf16.xpose.msra.mxu0 0
    %650 = vmatprep.subr.bf16.mxu0 0
    %651 = vmatpush1.bf16.xpose.msra.mxu0 0
    %652 = vmatprep.subr.bf16.mxu0 0
    %653 = vmatpush1.bf16.xpose.msra.mxu0 0
    %654 = vmatprep.subr.bf16.mxu0 0
    %655 = vmatpush1.bf16.xpose.msra.mxu0 0
    %656 = vmatprep.mubr.bf16.mxu0 0
    %657 = vmatmul.mubr.bf16.gmra.mrb[0].mxu0 %v619
    %v658 = vpop.f32.mrb[0].mxu0
    %v659 = vadd.f32 0.0, %v658
    %v660 = vpop.f32.mrb[0].mxu0
    %v661 = vpop.f32.mrb[0].mxu0
    %v662 = vpop.f32.mrb[0].mxu0
    %663 = vdwg.mxu0
    %v664 = vsel %vm346, %v607, -inf
    %665 = vmax.xlane.f32.xlu0 %v664
    %v666 = vpop.xlane.xlu0 %665
    %v667 = vsel %vm346, %v659, -inf
    %668 = vmax.xlane.f32.xlu0 %v667
    %v669 = vpop.xlane.xlu0 %668
    %v670 = vsub.f32 %v607, %v666
    %v671 = vsub.f32 %v659, %v669
    %v672 = vmul.f32 %v670, 1.442695
    %v673 = vpow.pop %v672
    %v674 = vmul.f32 %v671, 1.442695
    %v675 = vpow.pop %v674
    %v676 = vsel %vm346, %v673, 0.0
    %677 = vadd.xlane.f32.xlu0 %v676
    %v678 = vpop.xlane.xlu0 %677
    %v679 = vsel %vm346, %v675, 0.0
    %680 = vadd.xlane.f32.xlu0 %v679
    %v681 = vpop.xlane.xlu0 %680
    %v682 = vrcp.pop %v678
    %v683 = vrcp.pop %v681
    %v684 = vmul.f32 %v673, %v682
    %v685 = vmul.f32 %v675, %v683
    %v686 = vpack.c.bf16 %v684, %v684
    %v687 = vpack.c.bf16 %v685, %v685
    %s688 = scalar_lea.vmem [#allocation14], 16
    %689 = vst.msk [vmem:[%s688] sm:$0xff] %vm346, %v684
    %690 = vst.msk [vmem:[%s688 + $0x8] sm:$0xff] %vm346, %v685
    %692 = vrot.lane.b32.xlu0 %v344, 120
    %v693 = vpop.permute.xlu0 %692
    %v695 = vsel %vm346, %v686, 0
    %v698 = vsel %vm468, %v693, 0
    %700 = vmatprep.subr.bf16.mxu0 0
    %701 = vmatpush1.bf16.msra.mxu0 %v698
    %702 = vmatprep.subr.bf16.mxu0 0
    %703 = vmatpush1.bf16.msra.mxu0 0
    %704 = vmatprep.subr.bf16.mxu0 0
    %705 = vmatpush1.bf16.msra.mxu0 0
    %706 = vmatprep.subr.bf16.mxu0 0
    %707 = vmatpush1.bf16.msra.mxu0 0
    %708 = vmatprep.subr.bf16.mxu0 0
    %709 = vmatpush1.bf16.msra.mxu0 0
    %710 = vmatprep.subr.bf16.mxu0 0
    %711 = vmatpush1.bf16.msra.mxu0 0
    %712 = vmatprep.subr.bf16.mxu0 0
    %713 = vmatpush1.bf16.msra.mxu0 0
    %714 = vmatprep.subr.bf16.mxu0 0
    %715 = vmatpush1.bf16.msra.mxu0 0
    %716 = vmatprep.subr.bf16.mxu0 0
    %717 = vmatpush1.bf16.msra.mxu0 0
    %718 = vmatprep.subr.bf16.mxu0 0
    %719 = vmatpush1.bf16.msra.mxu0 0
    %720 = vmatprep.subr.bf16.mxu0 0
    %721 = vmatpush1.bf16.msra.mxu0 0
    %722 = vmatprep.subr.bf16.mxu0 0
    %723 = vmatpush1.bf16.msra.mxu0 0
    %724 = vmatprep.subr.bf16.mxu0 0
    %725 = vmatpush1.bf16.msra.mxu0 0
    %726 = vmatprep.subr.bf16.mxu0 0
    %727 = vmatpush1.bf16.msra.mxu0 0
    %728 = vmatprep.subr.bf16.mxu0 0
    %729 = vmatpush1.bf16.msra.mxu0 0
    %730 = vmatprep.subr.bf16.mxu0 0
    %731 = vmatpush1.bf16.msra.mxu0 0
    %732 = vmatprep.mubr.bf16.mxu0 0
    %733 = vmatmul.mubr.bf16.gmra.mrb[0].mxu0 %v695
    %v734 = vpop.f32.mrb[0].mxu0
    %v735 = vadd.f32 0.0, %v734
    %v736 = vpop.f32.mrb[0].mxu0
    %v737 = vpop.f32.mrb[0].mxu0
    %v738 = vpop.f32.mrb[0].mxu0
    %739 = vdwg.mxu0
    %741 = vrot.lane.b32.xlu0 %v345, 120
    %v742 = vpop.permute.xlu0 %741
    %v744 = vsel %vm346, %v687, 0
    %v747 = vsel %vm468, %v742, 0
    %749 = vmatprep.subr.bf16.mxu0 0
    %750 = vmatpush1.bf16.msra.mxu0 %v747
    %751 = vmatprep.subr.bf16.mxu0 0
    %752 = vmatpush1.bf16.msra.mxu0 0
    %753 = vmatprep.subr.bf16.mxu0 0
    %754 = vmatpush1.bf16.msra.mxu0 0
    %755 = vmatprep.subr.bf16.mxu0 0
    %756 = vmatpush1.bf16.msra.mxu0 0
    %757 = vmatprep.subr.bf16.mxu0 0
    %758 = vmatpush1.bf16.msra.mxu0 0
    %759 = vmatprep.subr.bf16.mxu0 0
    %760 = vmatpush1.bf16.msra.mxu0 0
    %761 = vmatprep.subr.bf16.mxu0 0
    %762 = vmatpush1.bf16.msra.mxu0 0
    %763 = vmatprep.subr.bf16.mxu0 0
    %764 = vmatpush1.bf16.msra.mxu0 0
    %765 = vmatprep.subr.bf16.mxu0 0
    %766 = vmatpush1.bf16.msra.mxu0 0
    %767 = vmatprep.subr.bf16.mxu0 0
    %768 = vmatpush1.bf16.msra.mxu0 0
    %769 = vmatprep.subr.bf16.mxu0 0
    %770 = vmatpush1.bf16.msra.mxu0 0
    %771 = vmatprep.subr.bf16.mxu0 0
    %772 = vmatpush1.bf16.msra.mxu0 0
    %773 = vmatprep.subr.bf16.mxu0 0
    %774 = vmatpush1.bf16.msra.mxu0 0
    %775 = vmatprep.subr.bf16.mxu0 0
    %776 = vmatpush1.bf16.msra.mxu0 0
    %777 = vmatprep.subr.bf16.mxu0 0
    %778 = vmatpush1.bf16.msra.mxu0 0
    %779 = vmatprep.subr.bf16.mxu0 0
    %780 = vmatpush1.bf16.msra.mxu0 0
    %781 = vmatprep.mubr.bf16.mxu0 0
    %782 = vmatmul.mubr.bf16.gmra.mrb[0].mxu0 %v744
    %v783 = vpop.f32.mrb[0].mxu0
    %v784 = vadd.f32 0.0, %v783
    %v785 = vpop.f32.mrb[0].mxu0
    %v786 = vpop.f32.mrb[0].mxu0
    %v787 = vpop.f32.mrb[0].mxu0
    %788 = vdwg.mxu0
    %v789 = vpack.c.bf16 %v735, %v735
    %v790 = vpack.c.bf16 %v784, %v784
    %791 = vrot.lane.b32.xlu0 %v340, 112
    %v792 = vpop.permute.xlu0 %791
    %793 = vrot.lane.b32.xlu0 %v342, 112
    %v794 = vpop.permute.xlu0 %793
    %v796 = vsel %vm346, %v792, 0
    %v799 = vsel %vm346, %v794, 0
    %801 = vmatprep.subr.bf16.mxu0 0
    %802 = vmatpush1.bf16.xpose.msra.mxu0 %v799
    %803 = vmatprep.subr.bf16.mxu0 0
    %804 = vmatpush1.bf16.xpose.msra.mxu0 0
    %805 = vmatprep.subr.bf16.mxu0 0
    %806 = vmatpush1.bf16.xpose.msra.mxu0 0
    %807 = vmatprep.subr.bf16.mxu0 0
    %808 = vmatpush1.bf16.xpose.msra.mxu0 0
    %809 = vmatprep.subr.bf16.mxu0 0
    %810 = vmatpush1.bf16.xpose.msra.mxu0 0
    %811 = vmatprep.subr.bf16.mxu0 0
    %812 = vmatpush1.bf16.xpose.msra.mxu0 0
    %813 = vmatprep.subr.bf16.mxu0 0
    %814 = vmatpush1.bf16.xpose.msra.mxu0 0
    %815 = vmatprep.subr.bf16.mxu0 0
    %816 = vmatpush1.bf16.xpose.msra.mxu0 0
    %817 = vmatprep.subr.bf16.mxu0 0
    %818 = vmatpush1.bf16.xpose.msra.mxu0 0
    %819 = vmatprep.subr.bf16.mxu0 0
    %820 = vmatpush1.bf16.xpose.msra.mxu0 0
    %821 = vmatprep.subr.bf16.mxu0 0
    %822 = vmatpush1.bf16.xpose.msra.mxu0 0
    %823 = vmatprep.subr.bf16.mxu0 0
    %824 = vmatpush1.bf16.xpose.msra.mxu0 0
    %825 = vmatprep.subr.bf16.mxu0 0
    %826 = vmatpush1.bf16.xpose.msra.mxu0 0
    %827 = vmatprep.subr.bf16.mxu0 0
    %828 = vmatpush1.bf16.xpose.msra.mxu0 0
    %829 = vmatprep.subr.bf16.mxu0 0
    %830 = vmatpush1.bf16.xpose.msra.mxu0 0
    %831 = vmatprep.subr.bf16.mxu0 0
    %832 = vmatpush1.bf16.xpose.msra.mxu0 0
    %833 = vmatprep.mubr.bf16.mxu0 0
    %834 = vmatmul.mubr.bf16.gmra.mrb[0].mxu0 %v796
    %v835 = vpop.f32.mrb[0].mxu0
    %v836 = vadd.f32 0.0, %v835
    %v837 = vpop.f32.mrb[0].mxu0
    %v838 = vpop.f32.mrb[0].mxu0
    %v839 = vpop.f32.mrb[0].mxu0
    %840 = vdwg.mxu0
    %841 = vrot.lane.b32.xlu0 %v341, 112
    %v842 = vpop.permute.xlu0 %841
    %843 = vrot.lane.b32.xlu0 %v343, 112
    %v844 = vpop.permute.xlu0 %843
    %v846 = vsel %vm346, %v842, 0
    %v849 = vsel %vm346, %v844, 0
    %851 = vmatprep.subr.bf16.mxu0 0
    %852 = vmatpush1.bf16.xpose.msra.mxu0 %v849
    %853 = vmatprep.subr.bf16.mxu0 0
    %854 = vmatpush1.bf16.xpose.msra.mxu0 0
    %855 = vmatprep.subr.bf16.mxu0 0
    %856 = vmatpush1.bf16.xpose.msra.mxu0 0
    %857 = vmatprep.subr.bf16.mxu0 0
    %858 = vmatpush1.bf16.xpose.msra.mxu0 0
    %859 = vmatprep.subr.bf16.mxu0 0
    %860 = vmatpush1.bf16.xpose.msra.mxu0 0
    %861 = vmatprep.subr.bf16.mxu0 0
    %862 = vmatpush1.bf16.xpose.msra.mxu0 0
    %863 = vmatprep.subr.bf16.mxu0 0
    %864 = vmatpush1.bf16.xpose.msra.mxu0 0
    %865 = vmatprep.subr.bf16.mxu0 0
    %866 = vmatpush1.bf16.xpose.msra.mxu0 0
    %867 = vmatprep.subr.bf16.mxu0 0
    %868 = vmatpush1.bf16.xpose.msra.mxu0 0
    %869 = vmatprep.subr.bf16.mxu0 0
    %870 = vmatpush1.bf16.xpose.msra.mxu0 0
    %871 = vmatprep.subr.bf16.mxu0 0
    %872 = vmatpush1.bf16.xpose.msra.mxu0 0
    %873 = vmatprep.subr.bf16.mxu0 0
    %874 = vmatpush1.bf16.xpose.msra.mxu0 0
    %875 = vmatprep.subr.bf16.mxu0 0
    %876 = vmatpush1.bf16.xpose.msra.mxu0 0
    %877 = vmatprep.subr.bf16.mxu0 0
    %878 = vmatpush1.bf16.xpose.msra.mxu0 0
    %879 = vmatprep.subr.bf16.mxu0 0
    %880 = vmatpush1.bf16.xpose.msra.mxu0 0
    %881 = vmatprep.subr.bf16.mxu0 0
    %882 = vmatpush1.bf16.xpose.msra.mxu0 0
    %883 = vmatprep.mubr.bf16.mxu0 0
    %884 = vmatmul.mubr.bf16.gmra.mrb[0].mxu0 %v846
    %v885 = vpop.f32.mrb[0].mxu0
    %v886 = vadd.f32 0.0, %v885
    %v887 = vpop.f32.mrb[0].mxu0
    %v888 = vpop.f32.mrb[0].mxu0
    %v889 = vpop.f32.mrb[0].mxu0
    %890 = vdwg.mxu0
    %v891 = vsel %vm346, %v836, -inf
    %892 = vmax.xlane.f32.xlu0 %v891
    %v893 = vpop.xlane.xlu0 %892
    %v894 = vsel %vm346, %v886, -inf
    %895 = vmax.xlane.f32.xlu0 %v894
    %v896 = vpop.xlane.xlu0 %895
    %v897 = vsub.f32 %v836, %v893
    %v898 = vsub.f32 %v886, %v896
    %v899 = vmul.f32 %v897, 1.442695
    %v900 = vpow.pop %v899
    %v901 = vmul.f32 %v898, 1.442695
    %v902 = vpow.pop %v901
    %v903 = vsel %vm346, %v900, 0.0
    %904 = vadd.xlane.f32.xlu0 %v903
    %v905 = vpop.xlane.xlu0 %904
    %v906 = vsel %vm346, %v902, 0.0
    %907 = vadd.xlane.f32.xlu0 %v906
    %v908 = vpop.xlane.xlu0 %907
    %v909 = vrcp.pop %v905
    %v910 = vrcp.pop %v908
    %v911 = vmul.f32 %v900, %v909
    %v912 = vmul.f32 %v902, %v910
    %v913 = vpack.c.bf16 %v911, %v911
    %v914 = vpack.c.bf16 %v912, %v912
    %s915 = scalar_lea.vmem [#allocation14], 32
    %916 = vst.msk [vmem:[%s915] sm:$0xff] %vm346, %v911
    %917 = vst.msk [vmem:[%s915 + $0x8] sm:$0xff] %vm346, %v912
    %918 = vrot.lane.b32.xlu0 %v344, 112
    %v919 = vpop.permute.xlu0 %918
    %v921 = vsel %vm346, %v913, 0
    %v924 = vsel %vm468, %v919, 0
    %926 = vmatprep.subr.bf16.mxu0 0
    %927 = vmatpush1.bf16.msra.mxu0 %v924
    %928 = vmatprep.subr.bf16.mxu0 0
    %929 = vmatpush1.bf16.msra.mxu0 0
    %930 = vmatprep.subr.bf16.mxu0 0
    %931 = vmatpush1.bf16.msra.mxu0 0
    %932 = vmatprep.subr.bf16.mxu0 0
    %933 = vmatpush1.bf16.msra.mxu0 0
    %934 = vmatprep.subr.bf16.mxu0 0
    %935 = vmatpush1.bf16.msra.mxu0 0
    %936 = vmatprep.subr.bf16.mxu0 0
    %937 = vmatpush1.bf16.msra.mxu0 0
    %938 = vmatprep.subr.bf16.mxu0 0
    %939 = vmatpush1.bf16.msra.mxu0 0
    %940 = vmatprep.subr.bf16.mxu0 0
    %941 = vmatpush1.bf16.msra.mxu0 0
    %942 = vmatprep.subr.bf16.mxu0 0
    %943 = vmatpush1.bf16.msra.mxu0 0
    %944 = vmatprep.subr.bf16.mxu0 0
    %945 = vmatpush1.bf16.msra.mxu0 0
    %946 = vmatprep.subr.bf16.mxu0 0
    %947 = vmatpush1.bf16.msra.mxu0 0
    %948 = vmatprep.subr.bf16.mxu0 0
    %949 = vmatpush1.bf16.msra.mxu0 0
    %950 = vmatprep.subr.bf16.mxu0 0
    %951 = vmatpush1.bf16.msra.mxu0 0
    %952 = vmatprep.subr.bf16.mxu0 0
    %953 = vmatpush1.bf16.msra.mxu0 0
    %954 = vmatprep.subr.bf16.mxu0 0
    %955 = vmatpush1.bf16.msra.mxu0 0
    %956 = vmatprep.subr.bf16.mxu0 0
    %957 = vmatpush1.bf16.msra.mxu0 0
    %958 = vmatprep.mubr.bf16.mxu0 0
    %959 = vmatmul.mubr.bf16.gmra.mrb[0].mxu0 %v921
    %v960 = vpop.f32.mrb[0].mxu0
    %v961 = vadd.f32 0.0, %v960
    %v962 = vpop.f32.mrb[0].mxu0
    %v963 = vpop.f32.mrb[0].mxu0
    %v964 = vpop.f32.mrb[0].mxu0
    %965 = vdwg.mxu0
    %966 = vrot.lane.b32.xlu0 %v345, 112
    %v967 = vpop.permute.xlu0 %966
    %v969 = vsel %vm346, %v914, 0
    %v972 = vsel %vm468, %v967, 0
    %974 = vmatprep.subr.bf16.mxu0 0
    %975 = vmatpush1.bf16.msra.mxu0 %v972
    %976 = vmatprep.subr.bf16.mxu0 0
    %977 = vmatpush1.bf16.msra.mxu0 0
    %978 = vmatprep.subr.bf16.mxu0 0
    %979 = vmatpush1.bf16.msra.mxu0 0
    %980 = vmatprep.subr.bf16.mxu0 0
    %981 = vmatpush1.bf16.msra.mxu0 0
    %982 = vmatprep.subr.bf16.mxu0 0
    %983 = vmatpush1.bf16.msra.mxu0 0
    %984 = vmatprep.subr.bf16.mxu0 0
    %985 = vmatpush1.bf16.msra.mxu0 0
    %986 = vmatprep.subr.bf16.mxu0 0
    %987 = vmatpush1.bf16.msra.mxu0 0
    %988 = vmatprep.subr.bf16.mxu0 0
    %989 = vmatpush1.bf16.msra.mxu0 0
    %990 = vmatprep.subr.bf16.mxu0 0
    %991 = vmatpush1.bf16.msra.mxu0 0
    %992 = vmatprep.subr.bf16.mxu0 0
    %993 = vmatpush1.bf16.msra.mxu0 0
    %994 = vmatprep.subr.bf16.mxu0 0
    %995 = vmatpush1.bf16.msra.mxu0 0
    %996 = vmatprep.subr.bf16.mxu0 0
    %997 = vmatpush1.bf16.msra.mxu0 0
    %998 = vmatprep.subr.bf16.mxu0 0
    %999 = vmatpush1.bf16.msra.mxu0 0
    %1000 = vmatprep.subr.bf16.mxu0 0
    %1001 = vmatpush1.bf16.msra.mxu0 0
    %1002 = vmatprep.subr.bf16.mxu0 0
    %1003 = vmatpush1.bf16.msra.mxu0 0
    %1004 = vmatprep.subr.bf16.mxu0 0
    %1005 = vmatpush1.bf16.msra.mxu0 0
    %1006 = vmatprep.mubr.bf16.mxu0 0
    %1007 = vmatmul.mubr.bf16.gmra.mrb[0].mxu0 %v969
    %v1008 = vpop.f32.mrb[0].mxu0
    %v1009 = vadd.f32 0.0, %v1008
    %v1010 = vpop.f32.mrb[0].mxu0
    %v1011 = vpop.f32.mrb[0].mxu0
    %v1012 = vpop.f32.mrb[0].mxu0
    %1013 = vdwg.mxu0
    %v1014 = vpack.c.bf16 %v961, %v961
    %v1015 = vpack.c.bf16 %v1009, %v1009
    %1016 = vrot.lane.b32.xlu0 %v340, 104
    %v1017 = vpop.permute.xlu0 %1016
    %1018 = vrot.lane.b32.xlu0 %v342, 104
    %v1019 = vpop.permute.xlu0 %1018
    %v1021 = vsel %vm346, %v1017, 0
    %v1024 = vsel %vm346, %v1019, 0
    %1026 = vmatprep.subr.bf16.mxu0 0
    %1027 = vmatpush1.bf16.xpose.msra.mxu0 %v1024
    %1028 = vmatprep.subr.bf16.mxu0 0
    %1029 = vmatpush1.bf16.xpose.msra.mxu0 0
    %1030 = vmatprep.subr.bf16.mxu0 0
    %1031 = vmatpush1.bf16.xpose.msra.mxu0 0
    %1032 = vmatprep.subr.bf16.mxu0 0
    %1033 = vmatpush1.bf16.xpose.msra.mxu0 0
    %1034 = vmatprep.subr.bf16.mxu0 0
    %1035 = vmatpush1.bf16.xpose.msra.mxu0 0
    %1036 = vmatprep.subr.bf16.mxu0 0
    %1037 = vmatpush1.bf16.xpose.msra.mxu0 0
    %1038 = vmatprep.subr.bf16.mxu0 0
    %1039 = vmatpush1.bf16.xpose.msra.mxu0 0
    %1040 = vmatprep.subr.bf16.mxu0 0
    %1041 = vmatpush1.bf16.xpose.msra.mxu0 0
    %1042 = vmatprep.subr.bf16.mxu0 0
    %1043 = vmatpush1.bf16.xpose.msra.mxu0 0
    %1044 = vmatprep.subr.bf16.mxu0 0
    %1045 = vmatpush1.bf16.xpose.msra.mxu0 0
    %1046 = vmatprep.subr.bf16.mxu0 0
    %1047 = vmatpush1.bf16.xpose.msra.mxu0 0
    %1048 = vmatprep.subr.bf16.mxu0 0
    %1049 = vmatpush1.bf16.xpose.msra.mxu0 0
    %1050 = vmatprep.subr.bf16.mxu0 0
    %1051 = vmatpush1.bf16.xpose.msra.mxu0 0
    %1052 = vmatprep.subr.bf16.mxu0 0
    %1053 = vmatpush1.bf16.xpose.msra.mxu0 0
    %1054 = vmatprep.subr.bf16.mxu0 0
    %1055 = vmatpush1.bf16.xpose.msra.mxu0 0
    %1056 = vmatprep.subr.bf16.mxu0 0
    %1057 = vmatpush1.bf16.xpose.msra.mxu0 0
    %1058 = vmatprep.mubr.bf16.mxu0 0
    %1059 = vmatmul.mubr.bf16.gmra.mrb[0].mxu0 %v1021
    %v1060 = vpop.f32.mrb[0].mxu0
    %v1061 = vadd.f32 0.0, %v1060
    %v1062 = vpop.f32.mrb[0].mxu0
    %v1063 = vpop.f32.mrb[0].mxu0
    %v1064 = vpop.f32.mrb[0].mxu0
    %1065 = vdwg.mxu0
    %1066 = vrot.lane.b32.xlu0 %v341, 104
    %v1067 = vpop.permute.xlu0 %1066
    %1068 = vrot.lane.b32.xlu0 %v343, 104
    %v1069 = vpop.permute.xlu0 %1068
    %v1071 = vsel %vm346, %v1067, 0
    %v1074 = vsel %vm346, %v1069, 0
    %1076 = vmatprep.subr.bf16.mxu0 0
    %1077 = vmatpush1.bf16.xpose.msra.mxu0 %v1074
    %1078 = vmatprep.subr.bf16.mxu0 0
    %1079 = vmatpush1.bf16.xpose.msra.mxu0 0
    %1080 = vmatprep.subr.bf16.mxu0 0
    %1081 = vmatpush1.bf16.xpose.msra.mxu0 0
    %1082 = vmatprep.subr.bf16.mxu0 0
    %1083 = vmatpush1.bf16.xpose.msra.mxu0 0
    %1084 = vmatprep.subr.bf16.mxu0 0
    %1085 = vmatpush1.bf16.xpose.msra.mxu0 0
    %1086 = vmatprep.subr.bf16.mxu0 0
    %1087 = vmatpush1.bf16.xpose.msra.mxu0 0
    %1088 = vmatprep.subr.bf16.mxu0 0
    %1089 = vmatpush1.bf16.xpose.msra.mxu0 0
    %1090 = vmatprep.subr.bf16.mxu0 0
    %1091 = vmatpush1.bf16.xpose.msra.mxu0 0
    %1092 = vmatprep.subr.bf16.mxu0 0
    %1093 = vmatpush1.bf16.xpose.msra.mxu0 0
    %1094 = vmatprep.subr.bf16.mxu0 0
    %1095 = vmatpush1.bf16.xpose.msra.mxu0 0
    %1096 = vmatprep.subr.bf16.mxu0 0
    %1097 = vmatpush1.bf16.xpose.msra.mxu0 0
    %1098 = vmatprep.subr.bf16.mxu0 0
    %1099 = vmatpush1.bf16.xpose.msra.mxu0 0
    %1100 = vmatprep.subr.bf16.mxu0 0
    %1101 = vmatpush1.bf16.xpose.msra.mxu0 0
    %1102 = vmatprep.subr.bf16.mxu0 0
    %1103 = vmatpush1.bf16.xpose.msra.mxu0 0
    %1104 = vmatprep.subr.bf16.mxu0 0
    %1105 = vmatpush1.bf16.xpose.msra.mxu0 0
    %1106 = vmatprep.subr.bf16.mxu0 0
    %1107 = vmatpush1.bf16.xpose.msra.mxu0 0
    %1108 = vmatprep.mubr.bf16.mxu0 0
    %1109 = vmatmul.mubr.bf16.gmra.mrb[0].mxu0 %v1071
    %v1110 = vpop.f32.mrb[0].mxu0
    %v1111 = vadd.f32 0.0, %v1110
    %v1112 = vpop.f32.mrb[0].mxu0
    %v1113 = vpop.f32.mrb[0].mxu0
    %v1114 = vpop.f32.mrb[0].mxu0
    %1115 = vdwg.mxu0
    %v1116 = vsel %vm346, %v1061, -inf
    %1117 = vmax.xlane.f32.xlu0 %v1116
    %v1118 = vpop.xlane.xlu0 %1117
    %v1119 = vsel %vm346, %v1111, -inf
    %1120 = vmax.xlane.f32.xlu0 %v1119
    %v1121 = vpop.xlane.xlu0 %1120
    %v1122 = vsub.f32 %v1061, %v1118
    %v1123 = vsub.f32 %v1111, %v1121
    %v1124 = vmul.f32 %v1122, 1.442695
    %v1125 = vpow.pop %v1124
    %v1126 = vmul.f32 %v1123, 1.442695
    %v1127 = vpow.pop %v1126
    %v1128 = vsel %vm346, %v1125, 0.0
    %1129 = vadd.xlane.f32.xlu0 %v1128
    %v1130 = vpop.xlane.xlu0 %1129
    %v1131 = vsel %vm346, %v1127, 0.0
    %1132 = vadd.xlane.f32.xlu0 %v1131
    %v1133 = vpop.xlane.xlu0 %1132
    %v1134 = vrcp.pop %v1130
    %v1135 = vrcp.pop %v1133
    %v1136 = vmul.f32 %v1125, %v1134
    %v1137 = vmul.f32 %v1127, %v1135
    %v1138 = vpack.c.bf16 %v1136, %v1136
    %v1139 = vpack.c.bf16 %v1137, %v1137
    %s1140 = scalar_lea.vmem [#allocation14], 48
    %1141 = vst.msk [vmem:[%s1140] sm:$0xff] %vm346, %v1136
    %1142 = vst.msk [vmem:[%s1140 + $0x8] sm:$0xff] %vm346, %v1137
    %1143 = vrot.lane.b32.xlu0 %v344, 104
    %v1144 = vpop.permute.xlu0 %1143
    %v1146 = vsel %vm346, %v1138, 0
    %v1149 = vsel %vm468, %v1144, 0
    %1151 = vmatprep.subr.bf16.mxu0 0
    %1152 = vmatpush1.bf16.msra.mxu0 %v1149
    %1153 = vmatprep.subr.bf16.mxu0 0
    %1154 = vmatpush1.bf16.msra.mxu0 0
    %1155 = vmatprep.subr.bf16.mxu0 0
    %1156 = vmatpush1.bf16.msra.mxu0 0
    %1157 = vmatprep.subr.bf16.mxu0 0
    %1158 = vmatpush1.bf16.msra.mxu0 0
    %1159 = vmatprep.subr.bf16.mxu0 0
    %1160 = vmatpush1.bf16.msra.mxu0 0
    %1161 = vmatprep.subr.bf16.mxu0 0
    %1162 = vmatpush1.bf16.msra.mxu0 0
    %1163 = vmatprep.subr.bf16.mxu0 0
    %1164 = vmatpush1.bf16.msra.mxu0 0
    %1165 = vmatprep.subr.bf16.mxu0 0
    %1166 = vmatpush1.bf16.msra.mxu0 0
    %1167 = vmatprep.subr.bf16.mxu0 0
    %1168 = vmatpush1.bf16.msra.mxu0 0
    %1169 = vmatprep.subr.bf16.mxu0 0
    %1170 = vmatpush1.bf16.msra.mxu0 0
    %1171 = vmatprep.subr.bf16.mxu0 0
    %1172 = vmatpush1.bf16.msra.mxu0 0
    %1173 = vmatprep.subr.bf16.mxu0 0
    %1174 = vmatpush1.bf16.msra.mxu0 0
    %1175 = vmatprep.subr.bf16.mxu0 0
    %1176 = vmatpush1.bf16.msra.mxu0 0
    %1177 = vmatprep.subr.bf16.mxu0 0
    %1178 = vmatpush1.bf16.msra.mxu0 0
    %1179 = vmatprep.subr.bf16.mxu0 0
    %1180 = vmatpush1.bf16.msra.mxu0 0
    %1181 = vmatprep.subr.bf16.mxu0 0
    %1182 = vmatpush1.bf16.msra.mxu0 0
    %1183 = vmatprep.mubr.bf16.mxu0 0
    %1184 = vmatmul.mubr.bf16.gmra.mrb[0].mxu0 %v1146
    %v1185 = vpop.f32.mrb[0].mxu0
    %v1186 = vadd.f32 0.0, %v1185
    %v1187 = vpop.f32.mrb[0].mxu0
    %v1188 = vpop.f32.mrb[0].mxu0
    %v1189 = vpop.f32.mrb[0].mxu0
    %1190 = vdwg.mxu0
    %1191 = vrot.lane.b32.xlu0 %v345, 104
    %v1192 = vpop.permute.xlu0 %1191
    %v1194 = vsel %vm346, %v1139, 0
    %v1197 = vsel %vm468, %v1192, 0
    %1199 = vmatprep.subr.bf16.mxu0 0
    %1200 = vmatpush1.bf16.msra.mxu0 %v1197
    %1201 = vmatprep.subr.bf16.mxu0 0
    %1202 = vmatpush1.bf16.msra.mxu0 0
    %1203 = vmatprep.subr.bf16.mxu0 0
    %1204 = vmatpush1.bf16.msra.mxu0 0
    %1205 = vmatprep.subr.bf16.mxu0 0
    %1206 = vmatpush1.bf16.msra.mxu0 0
    %1207 = vmatprep.subr.bf16.mxu0 0
    %1208 = vmatpush1.bf16.msra.mxu0 0
    %1209 = vmatprep.subr.bf16.mxu0 0
    %1210 = vmatpush1.bf16.msra.mxu0 0
    %1211 = vmatprep.subr.bf16.mxu0 0
    %1212 = vmatpush1.bf16.msra.mxu0 0
    %1213 = vmatprep.subr.bf16.mxu0 0
    %1214 = vmatpush1.bf16.msra.mxu0 0
    %1215 = vmatprep.subr.bf16.mxu0 0
    %1216 = vmatpush1.bf16.msra.mxu0 0
    %1217 = vmatprep.subr.bf16.mxu0 0
    %1218 = vmatpush1.bf16.msra.mxu0 0
    %1219 = vmatprep.subr.bf16.mxu0 0
    %1220 = vmatpush1.bf16.msra.mxu0 0
    %1221 = vmatprep.subr.bf16.mxu0 0
    %1222 = vmatpush1.bf16.msra.mxu0 0
    %1223 = vmatprep.subr.bf16.mxu0 0
    %1224 = vmatpush1.bf16.msra.mxu0 0
    %1225 = vmatprep.subr.bf16.mxu0 0
    %1226 = vmatpush1.bf16.msra.mxu0 0
    %1227 = vmatprep.subr.bf16.mxu0 0
    %1228 = vmatpush1.bf16.msra.mxu0 0
    %1229 = vmatprep.subr.bf16.mxu0 0
    %1230 = vmatpush1.bf16.msra.mxu0 0
    %1231 = vmatprep.mubr.bf16.mxu0 0
    %1232 = vmatmul.mubr.bf16.gmra.mrb[0].mxu0 %v1194
    %v1233 = vpop.f32.mrb[0].mxu0
    %v1234 = vadd.f32 0.0, %v1233
    %v1235 = vpop.f32.mrb[0].mxu0
    %v1236 = vpop.f32.mrb[0].mxu0
    %v1237 = vpop.f32.mrb[0].mxu0
    %1238 = vdwg.mxu0
    %v1239 = vpack.c.bf16 %v1186, %v1186
    %v1240 = vpack.c.bf16 %v1234, %v1234
    %1243 = vrot.lane.b32.xlu0 %v789, 8
    %v1244 = vpop.permute.xlu0 %1243
    %1245 = vrot.lane.b32.xlu0 %v790, 8
    %v1246 = vpop.permute.xlu0 %1245
    %1249 = vrot.lane.b32.xlu0 %v1014, 16
    %v1250 = vpop.permute.xlu0 %1249
    %1251 = vrot.lane.b32.xlu0 %v1015, 16
    %v1252 = vpop.permute.xlu0 %1251
    %1255 = vrot.lane.b32.xlu0 %v1239, 24
    %v1256 = vpop.permute.xlu0 %1255
    %1257 = vrot.lane.b32.xlu0 %v1240, 24
    %v1258 = vpop.permute.xlu0 %1257
    %v1261 = vsel %vm346, %v558, %v1244
    %v1264 = vsel %vm346, %v559, %v1246
    %vm1265 = vcmask 130048
    %v1267 = vsel %vm1265, %v1261, %v1250
    %v1269 = vsel %vm1265, %v1264, %v1252
    %vm1270 = vcmask 195584
    %v1272 = vsel %vm1270, %v1267, %v1256
    %v1274 = vsel %vm1270, %v1269, %v1258
    %v1275 = vld [vmem:[%s9] sm:$0xf]
    %v1276 = vld [vmem:[%s9 + $0x4] sm:$0xf]
    %v1277 = vld [vmem:[%s9 + $0x8] sm:$0xf]
    %v1278 = vld [vmem:[%s9 + $0xc] sm:$0xf]
    %v1281 = vunpack.c.l.b16 %v1272
    %v1282 = vunpack.c.l.b16 %v1274
    %v1283 = vpack.c.b16 %v1282, %v1281
    %v1288 = vunpack.c.l.b16 %v1275
    %v1289 = vunpack.c.l.b16 %v1276
    %v1290 = vunpack.c.l.b16 %v1277
    %v1291 = vunpack.c.l.b16 %v1278
    %v1292 = vpack.c.b16 %v1289, %v1288
    %v1293 = vpack.c.b16 %v1291, %v1290
    %v1297 = vsel %vm161, %v1283, 0
    %1299 = vmatprep.subr.bf16.mxu0 0
    %1300 = vmatpush1.bf16.msra.mxu0 %v1292
    %1301 = vmatprep.subr.bf16.mxu0 0
    %1302 = vmatpush1.bf16.msra.mxu0 %v1293
    %1303 = vmatprep.subr.bf16.mxu0 0
    %1304 = vmatpush1.bf16.msra.mxu0 0
    %1305 = vmatprep.subr.bf16.mxu0 0
    %1306 = vmatpush1.bf16.msra.mxu0 0
    %1307 = vmatprep.subr.bf16.mxu0 0
    %1308 = vmatpush1.bf16.msra.mxu0 0
    %1309 = vmatprep.subr.bf16.mxu0 0
    %1310 = vmatpush1.bf16.msra.mxu0 0
    %1311 = vmatprep.subr.bf16.mxu0 0
    %1312 = vmatpush1.bf16.msra.mxu0 0
    %1313 = vmatprep.subr.bf16.mxu0 0
    %1314 = vmatpush1.bf16.msra.mxu0 0
    %1315 = vmatprep.subr.bf16.mxu0 0
    %1316 = vmatpush1.bf16.msra.mxu0 0
    %1317 = vmatprep.subr.bf16.mxu0 0
    %1318 = vmatpush1.bf16.msra.mxu0 0
    %1319 = vmatprep.subr.bf16.mxu0 0
    %1320 = vmatpush1.bf16.msra.mxu0 0
    %1321 = vmatprep.subr.bf16.mxu0 0
    %1322 = vmatpush1.bf16.msra.mxu0 0
    %1323 = vmatprep.subr.bf16.mxu0 0
    %1324 = vmatpush1.bf16.msra.mxu0 0
    %1325 = vmatprep.subr.bf16.mxu0 0
    %1326 = vmatpush1.bf16.msra.mxu0 0
    %1327 = vmatprep.subr.bf16.mxu0 0
    %1328 = vmatpush1.bf16.msra.mxu0 0
    %1329 = vmatprep.subr.bf16.mxu0 0
    %1330 = vmatpush1.bf16.msra.mxu0 0
    %1331 = vmatprep.mubr.bf16.mxu0 0
    %1332 = vmatmul.mubr.bf16.gmra.mrb[0].mxu0 %v1297
    %v1333 = vpop.f32.mrb[0].mxu0
    %v1334 = vadd.f32 0.0, %v1333
    %v1335 = vpop.f32.mrb[0].mxu0
    %v1336 = vpop.f32.mrb[0].mxu0
    %v1337 = vadd.f32 0.0, %v1336
    %v1338 = vpop.f32.mrb[0].mxu0
    %1339 = vdwg.mxu0
    %v1340 = vld [vmem:[%s10] sm:$0x1]
    %v1342 = vlaneseq
    %v1343 = vshrl.u32 %v1342, 7
    %v1344 = vsub.s32 0, %v1343
    %v1345 = vrot.slane %v1340, %v1344
    %v1347 = vadd.f32 %v1334, %v1345
    %v1348 = vadd.f32 %v1337, %v1345
    %v1349 = vadd.f32 %v1347, %v129
    %v1350 = vadd.f32 %v1348, %v130
    %v1351 = vsel %vm161, %v1349, 0.0
    %1352 = vadd.xlane.f32.xlu0 %v1351
    %v1353 = vpop.xlane.xlu0 %1352
    %v1354 = vsel %vm161, %v1350, 0.0
    %1355 = vadd.xlane.f32.xlu0 %v1354
    %v1356 = vpop.xlane.xlu0 %1355
    %v1357 = vrcp.pop 32.0
    %v1358 = vmul.f32 %v1353, %v1357
    %v1359 = vmul.f32 %v1356, %v1357
    %v1360 = vsub.f32 %v1349, %v1358
    %v1361 = vsub.f32 %v1350, %v1359
    %v1362 = vmul.f32 %v1360, %v1360
    %v1363 = vmul.f32 %v1361, %v1361
    %v1364 = vsel %vm161, %v1362, 0.0
    %1365 = vadd.xlane.f32.xlu0 %v1364
    %v1366 = vpop.xlane.xlu0 %1365
    %v1367 = vsel %vm161, %v1363, 0.0
    %1368 = vadd.xlane.f32.xlu0 %v1367
    %v1369 = vpop.xlane.xlu0 %1368
    %v1370 = vmul.f32 %v1366, %v1357
    %v1371 = vmul.f32 %v1369, %v1357
    %v1372 = vadd.f32 %v1370, 1e-05
    %v1373 = vadd.f32 %v1371, 1e-05
    %v1374 = vrsqrt.pop %v1372
    %v1375 = vrsqrt.pop %v1373
    %v1376 = vmul.f32 %v1360, %v1374
    %v1377 = vmul.f32 %v1361, %v1375
    %v1378 = vld [vmem:[%s11] sm:$0x1]
    %v1380 = vlaneseq
    %v1381 = vshrl.u32 %v1380, 7
    %v1382 = vsub.s32 0, %v1381
    %v1383 = vrot.slane %v1378, %v1382
    %v1385 = vmul.f32 %v1376, %v1383
    %v1386 = vmul.f32 %v1377, %v1383
    %v1387 = vld [vmem:[%s12] sm:$0x1]
    %v1389 = vlaneseq
    %v1390 = vshrl.u32 %v1389, 7
    %v1391 = vsub.s32 0, %v1390
    %v1392 = vrot.slane %v1387, %v1391
    %v1394 = vadd.f32 %v1385, %v1392
    %v1395 = vadd.f32 %v1386, %v1392
    %1396 = vst.msk [vmem:[#allocation13] sm:$0xff] %vm161, %v1394
    %1397 = vst.msk [vmem:[#allocation13 + $0x8] sm:$0xff] %vm161, %v1395
    // Predicated region
    $region78: #{tpu_custom_call.1} parent=1 // pred_check
      _
    $region79: #{tpu_custom_call.1} parent=1 // pred_check_branch
      %1399 = sbr.rel (0) target = $region81
    $region80: #{tpu_custom_call.1} parent=1 // pred_region
      %s1401 = ssub.s32 256, 256
      %1402 = vsyncadd [#allocation4], %s1401
      %s1403 = sshll.u32 [#allocation13], 4
      %s1404 = int_to_ptr.vmem [resolvable:$true] %s1403
      %1409 = dma.vmem_to_hbm [thread:$0]  %s1404, 256, %s13, [#allocation4], 128, 128, 8
    $region81: #{tpu_custom_call.1} parent=1 // pred_fallthru
      _
    // Predicated region
    $region82: #{tpu_custom_call.1} parent=1 // pred_check
      _
    $region83: #{tpu_custom_call.1} parent=1 // pred_check_branch
      %1411 = sbr.rel (0) target = $region85
    $region84: #{tpu_custom_call.1} parent=1 // pred_region
      %s1413 = ssub.s32 1024, 1024
      %1414 = vsyncadd [#allocation15], %s1413
      %s1415 = sshll.u32 [#allocation14], 4
      %s1416 = int_to_ptr.vmem [resolvable:$true] %s1415
      %1421 = dma.vmem_to_hbm [thread:$0]  %s1416, 1024, %s14, [#allocation15], 128, 128, 8
    $region85: #{tpu_custom_call.1} parent=1 // pred_fallthru
      _
    // Predicated region
    $region86: #{tpu_custom_call.1} parent=1 // pred_check
      _
    $region87: #{tpu_custom_call.1} parent=1 // pred_check_branch
      %1423 = sbr.rel (0) target = $region89
    $region88: #{tpu_custom_call.1} parent=1 // pred_region
      %1424 = dma.done [#allocation4], 256
    $region89: #{tpu_custom_call.1} parent=1 // pred_fallthru
      _
    // Predicated region
    $region90: #{tpu_custom_call.1} parent=1 // pred_check
      _
    $region91: #{tpu_custom_call.1} parent=1 // pred_check_branch
      %1426 = sbr.rel (0) target = $region93
    $region92: #{tpu_custom_call.1} parent=1 // pred_region
      %1427 = dma.done [#allocation15], 1024
    $region93: #{tpu_custom_call.1} parent=1 // pred_fallthru
      _
    %1428 = vsyncpa [#allocation3], 1
    %1429 = vsyncpa [#allocation6], 1
    %1430 = vsyncpa [#allocation9], 1
    %1431 = vsyncpa [#allocation12], 1
    %1432 = vsyncpa [#allocation4], 1
    %1433 = vsyncpa [#allocation15], 1

</llo_original>
